<compile_context>
chip_gen: v7x
topology: tpu7x:2x2x1
jax: 0.10.0
libtpu: 0.0.40
codegen_flags: <defaults>
</compile_context>

<pallas_src>
import functools

import jax
import jax.numpy as jnp
from jax.experimental import pallas as pl
from jax.experimental.pallas import tpu as pltpu

EPS = 1e-5  # torch.nn.LayerNorm default


def _round_up(a, b):
    return (a + b - 1) // b * b


def _pick_tiling(M, tm_max):
    """Pick (TM, Mp): TM a multiple of 8 dividing Mp, as large as possible but
    keeping >= 2 grid steps (v7x megacore) and TM <= tm_max."""
    Mp = _round_up(max(M, 8), 8)
    tm_cap = min(_round_up(tm_max, 8), Mp)
    min_steps = 2 if Mp >= 16 else 1
    best = 8
    for t in range(8, tm_cap + 1, 8):
        if Mp % t == 0 and Mp // t >= min_steps:
            best = t
    return best, Mp


def prenorm_kernel(x_ref, c_ref, p_ref, wcat_ref, o_ref):
    d = x_ref.shape[-1]     # static
    dc = c_ref.shape[-1]    # static
    do = o_ref.shape[-1]    # static

    def layernorm(v, gamma, beta):
        v = v.astype(jnp.float32)
        mu = jnp.mean(v, axis=-1, keepdims=True)
        ctr = v - mu
        var = jnp.mean(ctr * ctr, axis=-1, keepdims=True)   # two-pass variance
        scale = gamma * jax.lax.rsqrt(var + EPS)             # rsqrt -> EUP slot
        return ctr * scale + beta

    # Packed resident params: rows are [gamma_x, beta_x, gamma_c, beta_c, bias]
    gx = p_ref[0:1, :d]
    bx = p_ref[1:2, :d]
    gc = p_ref[2:3, :dc]
    bc = p_ref[3:4, :dc]
    bias = p_ref[4:5, :do]

    xn = layernorm(x_ref[...], gx, bx)      # (TM, D)  f32
    cn = layernorm(c_ref[...], gc, bc)      # (TM, Dc) f32

    # fn(xn, context=cn): single fused K=(D+Dc) contraction on the MXU,
    # f32 accumulation, natural-width output (no column padding).
    wdt = wcat_ref.dtype
    xcat = jnp.concatenate([xn.astype(wdt), cn.astype(wdt)], axis=-1)  # (TM, K)
    out = jnp.dot(xcat, wcat_ref[...], preferred_element_type=jnp.float32)
    o_ref[...] = (out + bias).astype(o_ref.dtype)


@functools.partial(jax.jit, static_argnames=("tm_max", "matmul_dtype"))
def prenorm_pallas(x, context, params, *, tm_max=2048, matmul_dtype=jnp.bfloat16):
    """x: (B, N, D) f32, context: (B, N, Dc) f32 -> (B, N, D) f32."""
    B, N, D = x.shape
    Bc, Nc, Dc = context.shape
    assert (Bc, Nc) == (B, N)
    gx, bx, gc, bc, W, Wc, b = params

    M = B * N
    TM, Mp = _pick_tiling(M, tm_max)
    K = D + Dc

    x2 = x.reshape(M, D)
    c2 = context.reshape(M, Dc)
    if Mp != M:  # only when M is not 8-aligned; avoided for typical shapes
        x2 = jnp.pad(x2, ((0, Mp - M), (0, 0)))
        c2 = jnp.pad(c2, ((0, Mp - M), (0, 0)))

    # Pre-stacked weight (K, D): rows [0:D] multiply LayerNorm(x), rows
    # [D:D+Dc] multiply LayerNorm(context).  bf16 operands, f32 accumulation.
    wcat = jnp.concatenate([W, Wc], axis=0).astype(matmul_dtype)

    # Pack all small per-feature params into one resident (5, Wmax) buffer.
    Wmax = max(D, Dc)

    def _row(v):
        v = v.reshape(1, -1).astype(jnp.float32)
        return jnp.pad(v, ((0, 0), (0, Wmax - v.shape[1])))

    packed = jnp.concatenate(
        [_row(gx), _row(bx), _row(gc), _row(bc), _row(b)], axis=0)  # (5, Wmax)

    resident = lambda shape: pl.BlockSpec(shape, lambda i: (0, 0))

    cost = pl.CostEstimate(
        flops=2 * Mp * K * D,
        transcendentals=2 * Mp,  # one rsqrt per row per LayerNorm
        bytes_accessed=4 * Mp * (D + Dc + D)
        + wcat.size * wcat.dtype.itemsize
        + packed.size * 4,
    )

    out = pl.pallas_call(
        prenorm_kernel,
        out_shape=jax.ShapeDtypeStruct((Mp, D), x.dtype),
        grid=(Mp // TM,),
        in_specs=[
            pl.BlockSpec((TM, D), lambda i: (i, 0)),    # x tile (streamed)
            pl.BlockSpec((TM, Dc), lambda i: (i, 0)),   # context tile (streamed)
            resident((5, Wmax)),                        # packed gx/bx/gc/bc/b
            resident((K, D)),                           # stacked W|Wc (resident)
        ],
        out_specs=pl.BlockSpec((TM, D), lambda i: (i, 0)),
        compiler_params=pltpu.CompilerParams(
            dimension_semantics=("parallel",),
            vmem_limit_bytes=32 * 1024 * 1024,
        ),
        cost_estimate=cost,
    )(x2, c2, packed, wcat)

    if Mp != M:
        out = out[:M]
    return out.reshape(B, N, D)


def prenorm_reference(x, context, params):
    gx, bx, gc, bc, W, Wc, b = params

    def ln(v, g, beta):
        mu = jnp.mean(v, axis=-1, keepdims=True)
        var = jnp.mean((v - mu) ** 2, axis=-1, keepdims=True)
        return (v - mu) / jnp.sqrt(var + EPS) * g + beta

    xn = ln(x, gx.reshape(-1), bx.reshape(-1))
    cn = ln(context, gc.reshape(-1), bc.reshape(-1))
    return xn @ W + cn @ Wc + b.reshape(-1)


if __name__ == "__main__":
    # batch=2, seq=256, dim=32, context_dim=16 -> M=512 rows, TM=256, 2 tiles
    B, N, D, Dc = 2, 256, 32, 16

    key = jax.random.PRNGKey(0)
    kx, kc, k1, k2, k3, k4, k5, k6, k7 = jax.random.split(key, 9)

    x = jax.random.normal(kx, (B, N, D), dtype=jnp.float32)
    context = jax.random.normal(kc, (B, N, Dc), dtype=jnp.float32)

    # Deterministic params (LayerNorm affine perturbed so it is non-trivial).
    gamma_x = (1.0 + 0.1 * jax.random.normal(k1, (1, D))).astype(jnp.float32)
    beta_x = (0.1 * jax.random.normal(k2, (1, D))).astype(jnp.float32)
    gamma_c = (1.0 + 0.1 * jax.random.normal(k3, (1, Dc))).astype(jnp.float32)
    beta_c = (0.1 * jax.random.normal(k4, (1, Dc))).astype(jnp.float32)
    W = (jax.random.normal(k5, (D, D)) / jnp.sqrt(D)).astype(jnp.float32)
    Wc = (jax.random.normal(k6, (Dc, D)) / jnp.sqrt(Dc)).astype(jnp.float32)
    b = (0.1 * jax.random.normal(k7, (1, D))).astype(jnp.float32)

    params = (gamma_x, beta_x, gamma_c, beta_c, W, Wc, b)

    out = prenorm_pallas(x, context, params)  # bf16 MXU operands, f32 LN/acc
    out = jax.block_until_ready(out)

    ref = prenorm_reference(x, context, params)
    assert out.shape == (B, N, D)
    assert bool(jnp.all(jnp.isfinite(out)))
    err = jnp.max(jnp.abs(out - ref))
    # Tolerance accounts for bf16 matmul operands (f32 reference).
    assert jnp.allclose(out, ref, atol=5e-2, rtol=5e-2), f"max err {err}"

    print("KERNEL_OK")
</pallas_src>

<mosaic_0001>
module attributes {stable_mosaic.version = 11 : i64} {
  func.func @prenorm_kernel(%arg0: i32, %arg1: memref<256x32xf32, #tpu.memory_space<vmem>>, %arg2: memref<256x16xf32, #tpu.memory_space<vmem>>, %arg3: memref<5x32xf32, #tpu.memory_space<vmem>>, %arg4: memref<48x32xbf16, #tpu.memory_space<vmem>>, %arg5: memref<256x32xf32, #tpu.memory_space<vmem>>) attributes {dimension_semantics = [#tpu.dimension_semantics<parallel>], iteration_bounds = array<i64: 2>, scalar_prefetch = 0 : i64, scratch_operands = 0 : i64, tpu.core_type = #tpu.core_type<tc>, window_params = [{transform_indices = @transform_0, window_bounds = array<i64: 256, 32>}, {transform_indices = @transform_1, window_bounds = array<i64: 256, 16>}, {pipeline_mode = #tpu.pipeline_mode<synchronous>, transform_indices = @transform_2, window_bounds = array<i64: 5, 32>}, {pipeline_mode = #tpu.pipeline_mode<synchronous>, transform_indices = @transform_3, window_bounds = array<i64: 48, 32>}, {transform_indices = @transform_4, window_bounds = array<i64: 256, 32>}]} {
    %c0 = arith.constant 0 : index
    %c0_0 = arith.constant 0 : index
    %0 = vector.load %arg3[%c0, %c0_0] : memref<5x32xf32, #tpu.memory_space<vmem>>, vector<1x32xf32>
    %c1 = arith.constant 1 : index
    %c0_1 = arith.constant 0 : index
    %1 = vector.load %arg3[%c1, %c0_1] : memref<5x32xf32, #tpu.memory_space<vmem>>, vector<1x32xf32>
    %c2 = arith.constant 2 : index
    %c0_2 = arith.constant 0 : index
    %2 = vector.load %arg3[%c2, %c0_2] : memref<5x32xf32, #tpu.memory_space<vmem>>, vector<1x16xf32>
    %c3 = arith.constant 3 : index
    %c0_3 = arith.constant 0 : index
    %3 = vector.load %arg3[%c3, %c0_3] : memref<5x32xf32, #tpu.memory_space<vmem>>, vector<1x16xf32>
    %c4 = arith.constant 4 : index
    %c0_4 = arith.constant 0 : index
    %4 = vector.load %arg3[%c4, %c0_4] : memref<5x32xf32, #tpu.memory_space<vmem>>, vector<1x32xf32>
    %c0_5 = arith.constant 0 : index
    %c0_6 = arith.constant 0 : index
    %5 = vector.load %arg1[%c0_5, %c0_6] : memref<256x32xf32, #tpu.memory_space<vmem>>, vector<256x32xf32>
    %cst = arith.constant dense<0.000000e+00> : vector<256xf32>
    %6 = vector.multi_reduction <add>, %5, %cst [1] : vector<256x32xf32> to vector<256xf32>
    %7 = vector.shape_cast %6 : vector<256xf32> to vector<256x1xf32>
    %cst_7 = arith.constant 3.200000e+01 : f32
    %8 = vector.broadcast %cst_7 : f32 to vector<256x1xf32>
    %9 = arith.divf %7, %8 : vector<256x1xf32>
    %10 = vector.broadcast %9 : vector<256x1xf32> to vector<256x32xf32>
    %11 = arith.subf %5, %10 : vector<256x32xf32>
    %12 = arith.mulf %11, %11 : vector<256x32xf32>
    %cst_8 = arith.constant dense<0.000000e+00> : vector<256xf32>
    %13 = vector.multi_reduction <add>, %12, %cst_8 [1] : vector<256x32xf32> to vector<256xf32>
    %14 = vector.shape_cast %13 : vector<256xf32> to vector<256x1xf32>
    %cst_9 = arith.constant 3.200000e+01 : f32
    %15 = vector.broadcast %cst_9 : f32 to vector<256x1xf32>
    %16 = arith.divf %14, %15 : vector<256x1xf32>
    %cst_10 = arith.constant 9.99999974E-6 : f32
    %17 = vector.broadcast %cst_10 : f32 to vector<256x1xf32>
    %18 = arith.addf %16, %17 : vector<256x1xf32>
    %19 = math.rsqrt %18 : vector<256x1xf32>
    %20 = vector.broadcast %0 : vector<1x32xf32> to vector<256x32xf32>
    %21 = vector.broadcast %19 : vector<256x1xf32> to vector<256x32xf32>
    %22 = arith.mulf %20, %21 : vector<256x32xf32>
    %23 = arith.mulf %11, %22 : vector<256x32xf32>
    %24 = vector.broadcast %1 : vector<1x32xf32> to vector<256x32xf32>
    %25 = arith.addf %23, %24 : vector<256x32xf32>
    %c0_11 = arith.constant 0 : index
    %c0_12 = arith.constant 0 : index
    %26 = vector.load %arg2[%c0_11, %c0_12] : memref<256x16xf32, #tpu.memory_space<vmem>>, vector<256x16xf32>
    %cst_13 = arith.constant dense<0.000000e+00> : vector<256xf32>
    %27 = vector.multi_reduction <add>, %26, %cst_13 [1] : vector<256x16xf32> to vector<256xf32>
    %28 = vector.shape_cast %27 : vector<256xf32> to vector<256x1xf32>
    %cst_14 = arith.constant 1.600000e+01 : f32
    %29 = vector.broadcast %cst_14 : f32 to vector<256x1xf32>
    %30 = arith.divf %28, %29 : vector<256x1xf32>
    %31 = vector.broadcast %30 : vector<256x1xf32> to vector<256x16xf32>
    %32 = arith.subf %26, %31 : vector<256x16xf32>
    %33 = arith.mulf %32, %32 : vector<256x16xf32>
    %cst_15 = arith.constant dense<0.000000e+00> : vector<256xf32>
    %34 = vector.multi_reduction <add>, %33, %cst_15 [1] : vector<256x16xf32> to vector<256xf32>
    %35 = vector.shape_cast %34 : vector<256xf32> to vector<256x1xf32>
    %cst_16 = arith.constant 1.600000e+01 : f32
    %36 = vector.broadcast %cst_16 : f32 to vector<256x1xf32>
    %37 = arith.divf %35, %36 : vector<256x1xf32>
    %cst_17 = arith.constant 9.99999974E-6 : f32
    %38 = vector.broadcast %cst_17 : f32 to vector<256x1xf32>
    %39 = arith.addf %37, %38 : vector<256x1xf32>
    %40 = math.rsqrt %39 : vector<256x1xf32>
    %41 = vector.broadcast %2 : vector<1x16xf32> to vector<256x16xf32>
    %42 = vector.broadcast %40 : vector<256x1xf32> to vector<256x16xf32>
    %43 = arith.mulf %41, %42 : vector<256x16xf32>
    %44 = arith.mulf %32, %43 : vector<256x16xf32>
    %45 = vector.broadcast %3 : vector<1x16xf32> to vector<256x16xf32>
    %46 = arith.addf %44, %45 : vector<256x16xf32>
    %47 = arith.truncf %25 : vector<256x32xf32> to vector<256x32xbf16>
    %48 = arith.truncf %46 : vector<256x16xf32> to vector<256x16xbf16>
    %49 = tpu.concatenate %47, %48 in 1 : vector<256x32xbf16>, vector<256x16xbf16> -> vector<256x48xbf16>
    %c0_18 = arith.constant 0 : index
    %c0_19 = arith.constant 0 : index
    %50 = vector.load %arg4[%c0_18, %c0_19] : memref<48x32xbf16, #tpu.memory_space<vmem>>, vector<48x32xbf16>
    %cst_20 = arith.constant dense<0.000000e+00> : vector<256x32xf32>
    %51 = tpu.matmul %49, %50, %cst_20 {dimension_numbers = #tpu.dot_dimension_numbers<[1], [0], [0], [1], [0, 0, 1, 1], [], []>} : vector<256x48xbf16>, vector<48x32xbf16>, vector<256x32xf32> -> vector<256x32xf32>
    %52 = vector.broadcast %4 : vector<1x32xf32> to vector<256x32xf32>
    %53 = arith.addf %51, %52 : vector<256x32xf32>
    %c0_21 = arith.constant 0 : index
    %c0_22 = arith.constant 0 : index
    %54 = vector.load %arg5[%c0_21, %c0_22] : memref<256x32xf32, #tpu.memory_space<vmem>>, vector<256x32xf32>
    tpu.vector_store %arg5[%c0_21, %c0_22], %53 {strides = array<i32>} : memref<256x32xf32, #tpu.memory_space<vmem>>, vector<256x32xf32>,
    return
  }
  func.func @transform_0(%arg0: i32) -> (i32, i32) {
    %c0_i32 = arith.constant 0 : i32
    %c0_i32_0 = arith.constant 0 : i32
    return %arg0, %c0_i32 : i32, i32
  }
  func.func @transform_1(%arg0: i32) -> (i32, i32) {
    %c0_i32 = arith.constant 0 : i32
    %c0_i32_0 = arith.constant 0 : i32
    return %arg0, %c0_i32 : i32, i32
  }
  func.func @transform_2(%arg0: i32) -> (i32, i32) {
    %c0_i32 = arith.constant 0 : i32
    %c0_i32_0 = arith.constant 0 : i32
    %c0_i32_1 = arith.constant 0 : i32
    return %c0_i32, %c0_i32_0 : i32, i32
  }
  func.func @transform_3(%arg0: i32) -> (i32, i32) {
    %c0_i32 = arith.constant 0 : i32
    %c0_i32_0 = arith.constant 0 : i32
    %c0_i32_1 = arith.constant 0 : i32
    return %c0_i32, %c0_i32_0 : i32, i32
  }
  func.func @transform_4(%arg0: i32) -> (i32, i32) {
    %c0_i32 = arith.constant 0 : i32
    %c0_i32_0 = arith.constant 0 : i32
    return %arg0, %c0_i32 : i32, i32
  }
}

</mosaic_0001>

<llo_original>
// kernel: prenorm_pallas.1
$region0: #{prenorm_pallas.1}
  #allocation0 [shape = 'u32[]', space=smem, size = 0x4, offset = 0x4, fixed_abs, tag = 'smem constant byte address 0x4 - core index']
  #allocation1 [shape = 'u32[144,128]{1,0:T(1,128)}', space=vmem, size = 0x12000, scoped, tag = 'internal scratch']
  %s0 = inlined_call_operand.vmem [shape: f32[512,32], index: 0, kind: input, shape index: {}]
  %s1 = inlined_call_operand.vmem [shape: f32[512,16], index: 1, kind: input, shape index: {}]
  %s2 = inlined_call_operand.vmem [shape: f32[5,32], index: 2, kind: input, shape index: {}]
  %s3 = inlined_call_operand.vmem [shape: bf16[48,32], index: 3, kind: input, shape index: {}]
  %s4 = inlined_call_operand.vmem [shape: f32[512,32], index: 4, kind: output, shape index: {}]
  %s5 = sld [smem:[#allocation0]]
  $region49: #{prenorm_pallas.1} parent=0
    _
  %s7 = ssub.s32 1, %s5
  %s8 = scalar_select 0, %s7, %s5
  loop: start=0, step=1, limit=4
  $region2: #{prenorm_pallas.1} parent=0 // loop_pre_header
    _
  $region3: #{prenorm_pallas.1} parent=0 // loop_header
    %s10 = sphi 0, %s14
    %p11 = scmp.ge.s32.totalorder %s10, 4
    %s20 = sphi 0, %s22
    %s23 = sphi 0, %s20
    %s24 = sphi 0, %s23
    %s40 = sphi 0, %s24
    %s46 = sphi 0, %s48
    %s49 = sphi 0, %s46
    %s50 = sphi 0, %s49
    %s66 = sphi 0, %s50
    %s70 = sphi 0, %s70
    %s72 = sphi 0, %s70
    %s73 = sphi 0, %s72
    %s87 = sphi 0, %s73
    %s91 = sphi 0, %s91
    %s93 = sphi 0, %s91
    %s94 = sphi 0, %s93
    %s108 = sphi 0, %s94
    %s114 = sphi 0, %s116
    %s117 = sphi 0, %s114
    %s118 = sphi 0, %s117
    %s134 = sphi 0, %s118
  $region4: #{prenorm_pallas.1} parent=0 // loop_header_branch
    %13 = sbr.rel (%p11) target = $region8
  $region5: #{prenorm_pallas.1} parent=0 // loop_body
    %s15 = ssub.s32 %s10, 1
    %s16 = ssub.s32 %s10, 2
    %s17 = sadd.s32 %s10, 1
    %s18 = ssub.s32 %s10, %s17
    %p19 = scmp.eq.s32.totalorder %s18, 0
    %s21 = sadd.s32 %s20, 1
    %s22 = scalar_select %p19, %s20, %s21
    %p25 = pneg %p19
    %p26 = scmp.eq.s32.totalorder %s10, 1
    %p27 = por %p25, %p26
    %p28 = scmp.ne.s32.totalorder %s20, %s23
    %p29 = scmp.eq.s32.totalorder %s10, 0
    %p30 = por %p28, %p29
    %p31 = scmp.ne.s32.totalorder %s20, %s23
    %p32 = scmp.eq.s32.totalorder %s15, 1
    %p33 = por %p31, %p32
    %p34 = scmp.ne.s32.totalorder %s23, %s24
    %p35 = scmp.eq.s32.totalorder %s15, 0
    %p36 = por %p34, %p35
    %p37 = scmp.ne.s32.totalorder %s23, %s24
    %p38 = scmp.eq.s32.totalorder %s16, 1
    %p39 = por %p37, %p38
    %p41 = scmp.ne.s32.totalorder %s24, %s40
    %p42 = scmp.eq.s32.totalorder %s16, 0
    %p43 = por %p41, %p42
    %s44 = ssub.s32 %s10, %s17
    %p45 = scmp.eq.s32.totalorder %s44, 0
    %s47 = sadd.s32 %s46, 1
    %s48 = scalar_select %p45, %s46, %s47
    %p51 = pneg %p45
    %p52 = scmp.eq.s32.totalorder %s10, 1
    %p53 = por %p51, %p52
    %p54 = scmp.ne.s32.totalorder %s46, %s49
    %p55 = scmp.eq.s32.totalorder %s10, 0
    %p56 = por %p54, %p55
    %p57 = scmp.ne.s32.totalorder %s46, %s49
    %p58 = scmp.eq.s32.totalorder %s15, 1
    %p59 = por %p57, %p58
    %p60 = scmp.ne.s32.totalorder %s49, %s50
    %p61 = scmp.eq.s32.totalorder %s15, 0
    %p62 = por %p60, %p61
    %p63 = scmp.ne.s32.totalorder %s49, %s50
    %p64 = scmp.eq.s32.totalorder %s16, 1
    %p65 = por %p63, %p64
    %p67 = scmp.ne.s32.totalorder %s50, %s66
    %p68 = scmp.eq.s32.totalorder %s16, 0
    %p69 = por %p67, %p68
    %s71 = sadd.s32 %s70, 1
    %p74 = scmp.eq.s32.totalorder %s10, 1
    %p75 = scmp.ne.s32.totalorder %s70, %s72
    %p76 = scmp.eq.s32.totalorder %s10, 0
    %p77 = por %p75, %p76
    %p78 = scmp.ne.s32.totalorder %s70, %s72
    %p79 = scmp.eq.s32.totalorder %s15, 1
    %p80 = por %p78, %p79
    %p81 = scmp.ne.s32.totalorder %s72, %s73
    %p82 = scmp.eq.s32.totalorder %s15, 0
    %p83 = por %p81, %p82
    %p84 = scmp.ne.s32.totalorder %s72, %s73
    %p85 = scmp.eq.s32.totalorder %s16, 1
    %p86 = por %p84, %p85
    %p88 = scmp.ne.s32.totalorder %s73, %s87
    %p89 = scmp.eq.s32.totalorder %s16, 0
    %p90 = por %p88, %p89
    %s92 = sadd.s32 %s91, 1
    %p95 = scmp.eq.s32.totalorder %s10, 1
    %p96 = scmp.ne.s32.totalorder %s91, %s93
    %p97 = scmp.eq.s32.totalorder %s10, 0
    %p98 = por %p96, %p97
    %p99 = scmp.ne.s32.totalorder %s91, %s93
    %p100 = scmp.eq.s32.totalorder %s15, 1
    %p101 = por %p99, %p100
    %p102 = scmp.ne.s32.totalorder %s93, %s94
    %p103 = scmp.eq.s32.totalorder %s15, 0
    %p104 = por %p102, %p103
    %p105 = scmp.ne.s32.totalorder %s93, %s94
    %p106 = scmp.eq.s32.totalorder %s16, 1
    %p107 = por %p105, %p106
    %p109 = scmp.ne.s32.totalorder %s94, %s108
    %p110 = scmp.eq.s32.totalorder %s16, 0
    %p111 = por %p109, %p110
    %s112 = ssub.s32 %s10, %s17
    %p113 = scmp.eq.s32.totalorder %s112, 0
    %s115 = sadd.s32 %s114, 1
    %s116 = scalar_select %p113, %s114, %s115
    %p119 = pneg %p113
    %p120 = scmp.eq.s32.totalorder %s10, 1
    %p121 = por %p119, %p120
    %p122 = scmp.ne.s32.totalorder %s114, %s117
    %p123 = scmp.eq.s32.totalorder %s10, 0
    %p124 = por %p122, %p123
    %p125 = scmp.ne.s32.totalorder %s114, %s117
    %p126 = scmp.eq.s32.totalorder %s15, 1
    %p127 = por %p125, %p126
    %p128 = scmp.ne.s32.totalorder %s117, %s118
    %p129 = scmp.eq.s32.totalorder %s15, 0
    %p130 = por %p128, %p129
    %p131 = scmp.ne.s32.totalorder %s117, %s118
    %p132 = scmp.eq.s32.totalorder %s16, 1
    %p133 = por %p131, %p132
    %p135 = scmp.ne.s32.totalorder %s118, %s134
    %p136 = scmp.eq.s32.totalorder %s16, 0
    %p137 = por %p135, %p136
    %p138 = scmp.le.s32.totalorder 1, %s10
    %p139 = scmp.lt.s32.totalorder %s10, 3
    %p140 = pnand %p138, %p139
    %p141 = pneg %p140
    // Predicated region
    $region9: #{prenorm_pallas.1} parent=5 // pred_check
      _
    $region10: #{prenorm_pallas.1} parent=5 // pred_check_branch
      %143 = sbr.rel (%p140) target = $region12
    $region11: #{prenorm_pallas.1} parent=5 // pred_region
      %s144 = ssub.s32 %s10, 1
      // Predicated region
      $region13: #{prenorm_pallas.1} parent=11 // pred_check
        %p145 = pneg %p83
      $region14: #{prenorm_pallas.1} parent=11 // pred_check_branch
        %147 = sbr.rel (%p145) target = $region16
      $region15: #{prenorm_pallas.1} parent=11 // pred_region
        _
      $region16: #{prenorm_pallas.1} parent=11 // pred_fallthru
        _
      // Predicated region
      $region17: #{prenorm_pallas.1} parent=11 // pred_check
        %p148 = pneg %p104
      $region18: #{prenorm_pallas.1} parent=11 // pred_check_branch
        %150 = sbr.rel (%p148) target = $region20
      $region19: #{prenorm_pallas.1} parent=11 // pred_region
        _
      $region20: #{prenorm_pallas.1} parent=11 // pred_fallthru
        _
    $region12: #{prenorm_pallas.1} parent=5 // pred_fallthru
      _
    %p151 = scmp.lt.s32.totalorder %s10, 2
    // Predicated region
    $region21: #{prenorm_pallas.1} parent=5 // pred_check
      %p152 = pneg %p151
    $region22: #{prenorm_pallas.1} parent=5 // pred_check_branch
      %154 = sbr.rel (%p152) target = $region24
    $region23: #{prenorm_pallas.1} parent=5 // pred_region
      // Predicated region
      $region25: #{prenorm_pallas.1} parent=23 // pred_check
        %p155 = pneg %p30
      $region26: #{prenorm_pallas.1} parent=23 // pred_check_branch
        %157 = sbr.rel (%p155) target = $region28
      $region27: #{prenorm_pallas.1} parent=23 // pred_region
        %s158 = smul.u32 32, %s10
        %p159 = scmp.lt.s32.totalorder %s158, 63
        %s160 = scalar_select %p159, %s158, 63
        %s161 = smul.addr %s160, 8
        %s162 = scalar_lea.vmem %s0, %s161
        %s163 = smul.u32 32, %s10
      $region28: #{prenorm_pallas.1} parent=23 // pred_fallthru
        _
      // Predicated region
      $region29: #{prenorm_pallas.1} parent=23 // pred_check
        %p164 = pneg %p56
      $region30: #{prenorm_pallas.1} parent=23 // pred_check_branch
        %166 = sbr.rel (%p164) target = $region32
      $region31: #{prenorm_pallas.1} parent=23 // pred_region
        %s167 = smul.u32 32, %s10
        %p168 = scmp.lt.s32.totalorder %s167, 63
        %s169 = scalar_select %p168, %s167, 63
        %s170 = smul.addr %s169, 8
        %s171 = scalar_lea.vmem %s1, %s170
        %s172 = smul.u32 32, %s10
      $region32: #{prenorm_pallas.1} parent=23 // pred_fallthru
        _
    $region24: #{prenorm_pallas.1} parent=5 // pred_fallthru
      _
    %p173 = scmp.le.s32.totalorder 1, %s10
    %p174 = scmp.lt.s32.totalorder %s10, 3
    %p175 = pnand %p173, %p174
    %p176 = pneg %p175
    // Predicated region
    $region33: #{prenorm_pallas.1} parent=5 // pred_check
      _
    $region34: #{prenorm_pallas.1} parent=5 // pred_check_branch
      %178 = sbr.rel (%p175) target = $region36
    $region35: #{prenorm_pallas.1} parent=5 // pred_region
      %s179 = ssub.s32 %s10, 1
      %s180 = smul.u32 32, %s15
      %p181 = scmp.lt.s32.totalorder %s180, 63
      %s182 = scalar_select %p181, %s180, 63
      %s183 = smul.addr %s182, 8
      %s184 = scalar_lea.vmem %s0, %s183
      %p185 = pneg %p36
      %p186 = pneg %p33
      %s187 = smul.u32 32, %s15
      %p188 = scmp.lt.s32.totalorder %s187, 63
      %s189 = scalar_select %p188, %s187, 63
      %s190 = smul.addr %s189, 8
      %s191 = scalar_lea.vmem %s1, %s190
      %p192 = pneg %p62
      %p193 = pneg %p59
      %p194 = pneg %p83
      %p195 = pneg %p80
      %p196 = pneg %p104
      %p197 = pneg %p101
      %p198 = pneg %p130
      %p199 = pneg %p127
      %s200 = smul.u32 32, %s15
      %p201 = scmp.lt.s32.totalorder %s200, 63
      %s202 = scalar_select %p201, %s200, 63
      %s203 = smul.addr %s202, 8
      %s204 = scalar_lea.vmem %s4, %s203
      %s205 = smul.u32 32, %s15
      %p206 = scmp.lt.s32.totalorder %s205, 63
      %s207 = scalar_select %p206, %s205, 63
      %s208 = smul.addr %s207, 8
      %s209 = scalar_lea.vmem %s0, %s208
      %s210 = smul.u32 32, %s15
      %s211 = smul.u32 32, %s15
      %p212 = scmp.lt.s32.totalorder %s211, 63
      %s213 = scalar_select %p212, %s211, 63
      %s214 = smul.addr %s213, 8
      %s215 = scalar_lea.vmem %s1, %s214
      %s216 = smul.u32 32, %s15
      %s217 = smul.u32 32, %s15
      %p218 = scmp.lt.s32.totalorder %s217, 63
      %s219 = scalar_select %p218, %s217, 63
      %s220 = smul.addr %s219, 8
      %s221 = scalar_lea.vmem %s4, %s220
      %s222 = smul.u32 32, %s15
      %v224 = vld [vmem:[%s2] sm:$0x1]
      %v225 = vld [vmem:[%s2 + $0x1] sm:$0x1]
      %v226 = vld [vmem:[%s2 + $0x2] sm:$0x1]
      %v227 = vld [vmem:[%s2 + $0x3] sm:$0x1]
      %v228 = vld [vmem:[%s2 + $0x4] sm:$0x1]
      %v229 = vld [vmem:[%s209] sm:$0xff]
      %v230 = vld [vmem:[%s209 + $0x8] sm:$0xff]
      %v231 = vld [vmem:[%s209 + $0x10] sm:$0xff]
      %v232 = vld [vmem:[%s209 + $0x18] sm:$0xff]
      %v233 = vld [vmem:[%s209 + $0x20] sm:$0xff]
      %v234 = vld [vmem:[%s209 + $0x28] sm:$0xff]
      %v235 = vld [vmem:[%s209 + $0x30] sm:$0xff]
      %v236 = vld [vmem:[%s209 + $0x38] sm:$0xff]
      %v237 = vld [vmem:[%s209 + $0x40] sm:$0xff]
      %v238 = vld [vmem:[%s209 + $0x48] sm:$0xff]
      %v239 = vld [vmem:[%s209 + $0x50] sm:$0xff]
      %v240 = vld [vmem:[%s209 + $0x58] sm:$0xff]
      %v241 = vld [vmem:[%s209 + $0x60] sm:$0xff]
      %v242 = vld [vmem:[%s209 + $0x68] sm:$0xff]
      %v243 = vld [vmem:[%s209 + $0x70] sm:$0xff]
      %v244 = vld [vmem:[%s209 + $0x78] sm:$0xff]
      %v245 = vld [vmem:[%s209 + $0x80] sm:$0xff]
      %v246 = vld [vmem:[%s209 + $0x88] sm:$0xff]
      %v247 = vld [vmem:[%s209 + $0x90] sm:$0xff]
      %v248 = vld [vmem:[%s209 + $0x98] sm:$0xff]
      %v249 = vld [vmem:[%s209 + $0xa0] sm:$0xff]
      %v250 = vld [vmem:[%s209 + $0xa8] sm:$0xff]
      %v251 = vld [vmem:[%s209 + $0xb0] sm:$0xff]
      %v252 = vld [vmem:[%s209 + $0xb8] sm:$0xff]
      %v253 = vld [vmem:[%s209 + $0xc0] sm:$0xff]
      %v254 = vld [vmem:[%s209 + $0xc8] sm:$0xff]
      %v255 = vld [vmem:[%s209 + $0xd0] sm:$0xff]
      %v256 = vld [vmem:[%s209 + $0xd8] sm:$0xff]
      %v257 = vld [vmem:[%s209 + $0xe0] sm:$0xff]
      %v258 = vld [vmem:[%s209 + $0xe8] sm:$0xff]
      %v259 = vld [vmem:[%s209 + $0xf0] sm:$0xff]
      %v260 = vld [vmem:[%s209 + $0xf8] sm:$0xff]
      %vm261 = vcmask 261120
      %v262 = vsel %vm261, %v229, 0.0
      %263 = vadd.xlane.f32.xlu0 %v262
      %v264 = vpop.xlane.xlu0 %263
      %v265 = vsel %vm261, %v230, 0.0
      %266 = vadd.xlane.f32.xlu0 %v265
      %v267 = vpop.xlane.xlu0 %266
      %v268 = vsel %vm261, %v231, 0.0
      %269 = vadd.xlane.f32.xlu0 %v268
      %v270 = vpop.xlane.xlu0 %269
      %v271 = vsel %vm261, %v232, 0.0
      %272 = vadd.xlane.f32.xlu0 %v271
      %v273 = vpop.xlane.xlu0 %272
      %v274 = vsel %vm261, %v233, 0.0
      %275 = vadd.xlane.f32.xlu0 %v274
      %v276 = vpop.xlane.xlu0 %275
      %v277 = vsel %vm261, %v234, 0.0
      %278 = vadd.xlane.f32.xlu0 %v277
      %v279 = vpop.xlane.xlu0 %278
      %v280 = vsel %vm261, %v235, 0.0
      %281 = vadd.xlane.f32.xlu0 %v280
      %v282 = vpop.xlane.xlu0 %281
      %v283 = vsel %vm261, %v236, 0.0
      %284 = vadd.xlane.f32.xlu0 %v283
      %v285 = vpop.xlane.xlu0 %284
      %v286 = vsel %vm261, %v237, 0.0
      %287 = vadd.xlane.f32.xlu0 %v286
      %v288 = vpop.xlane.xlu0 %287
      %v289 = vsel %vm261, %v238, 0.0
      %290 = vadd.xlane.f32.xlu0 %v289
      %v291 = vpop.xlane.xlu0 %290
      %v292 = vsel %vm261, %v239, 0.0
      %293 = vadd.xlane.f32.xlu0 %v292
      %v294 = vpop.xlane.xlu0 %293
      %v295 = vsel %vm261, %v240, 0.0
      %296 = vadd.xlane.f32.xlu0 %v295
      %v297 = vpop.xlane.xlu0 %296
      %v298 = vsel %vm261, %v241, 0.0
      %299 = vadd.xlane.f32.xlu0 %v298
      %v300 = vpop.xlane.xlu0 %299
      %v301 = vsel %vm261, %v242, 0.0
      %302 = vadd.xlane.f32.xlu0 %v301
      %v303 = vpop.xlane.xlu0 %302
      %v304 = vsel %vm261, %v243, 0.0
      %305 = vadd.xlane.f32.xlu0 %v304
      %v306 = vpop.xlane.xlu0 %305
      %v307 = vsel %vm261, %v244, 0.0
      %308 = vadd.xlane.f32.xlu0 %v307
      %v309 = vpop.xlane.xlu0 %308
      %v310 = vsel %vm261, %v245, 0.0
      %311 = vadd.xlane.f32.xlu0 %v310
      %v312 = vpop.xlane.xlu0 %311
      %v313 = vsel %vm261, %v246, 0.0
      %314 = vadd.xlane.f32.xlu0 %v313
      %v315 = vpop.xlane.xlu0 %314
      %v316 = vsel %vm261, %v247, 0.0
      %317 = vadd.xlane.f32.xlu0 %v316
      %v318 = vpop.xlane.xlu0 %317
      %v319 = vsel %vm261, %v248, 0.0
      %320 = vadd.xlane.f32.xlu0 %v319
      %v321 = vpop.xlane.xlu0 %320
      %v322 = vsel %vm261, %v249, 0.0
      %323 = vadd.xlane.f32.xlu0 %v322
      %v324 = vpop.xlane.xlu0 %323
      %v325 = vsel %vm261, %v250, 0.0
      %326 = vadd.xlane.f32.xlu0 %v325
      %v327 = vpop.xlane.xlu0 %326
      %v328 = vsel %vm261, %v251, 0.0
      %329 = vadd.xlane.f32.xlu0 %v328
      %v330 = vpop.xlane.xlu0 %329
      %v331 = vsel %vm261, %v252, 0.0
      %332 = vadd.xlane.f32.xlu0 %v331
      %v333 = vpop.xlane.xlu0 %332
      %v334 = vsel %vm261, %v253, 0.0
      %335 = vadd.xlane.f32.xlu0 %v334
      %v336 = vpop.xlane.xlu0 %335
      %v337 = vsel %vm261, %v254, 0.0
      %338 = vadd.xlane.f32.xlu0 %v337
      %v339 = vpop.xlane.xlu0 %338
      %v340 = vsel %vm261, %v255, 0.0
      %341 = vadd.xlane.f32.xlu0 %v340
      %v342 = vpop.xlane.xlu0 %341
      %v343 = vsel %vm261, %v256, 0.0
      %344 = vadd.xlane.f32.xlu0 %v343
      %v345 = vpop.xlane.xlu0 %344
      %v346 = vsel %vm261, %v257, 0.0
      %347 = vadd.xlane.f32.xlu0 %v346
      %v348 = vpop.xlane.xlu0 %347
      %v349 = vsel %vm261, %v258, 0.0
      %350 = vadd.xlane.f32.xlu0 %v349
      %v351 = vpop.xlane.xlu0 %350
      %v352 = vsel %vm261, %v259, 0.0
      %353 = vadd.xlane.f32.xlu0 %v352
      %v354 = vpop.xlane.xlu0 %353
      %v355 = vsel %vm261, %v260, 0.0
      %356 = vadd.xlane.f32.xlu0 %v355
      %v357 = vpop.xlane.xlu0 %356
      %v358 = vrcp.pop 32.0
      %v359 = vmul.f32 %v264, %v358
      %v360 = vmul.f32 %v267, %v358
      %v361 = vmul.f32 %v270, %v358
      %v362 = vmul.f32 %v273, %v358
      %v363 = vmul.f32 %v276, %v358
      %v364 = vmul.f32 %v279, %v358
      %v365 = vmul.f32 %v282, %v358
      %v366 = vmul.f32 %v285, %v358
      %v367 = vmul.f32 %v288, %v358
      %v368 = vmul.f32 %v291, %v358
      %v369 = vmul.f32 %v294, %v358
      %v370 = vmul.f32 %v297, %v358
      %v371 = vmul.f32 %v300, %v358
      %v372 = vmul.f32 %v303, %v358
      %v373 = vmul.f32 %v306, %v358
      %v374 = vmul.f32 %v309, %v358
      %v375 = vmul.f32 %v312, %v358
      %v376 = vmul.f32 %v315, %v358
      %v377 = vmul.f32 %v318, %v358
      %v378 = vmul.f32 %v321, %v358
      %v379 = vmul.f32 %v324, %v358
      %v380 = vmul.f32 %v327, %v358
      %v381 = vmul.f32 %v330, %v358
      %v382 = vmul.f32 %v333, %v358
      %v383 = vmul.f32 %v336, %v358
      %v384 = vmul.f32 %v339, %v358
      %v385 = vmul.f32 %v342, %v358
      %v386 = vmul.f32 %v345, %v358
      %v387 = vmul.f32 %v348, %v358
      %v388 = vmul.f32 %v351, %v358
      %v389 = vmul.f32 %v354, %v358
      %v390 = vmul.f32 %v357, %v358
      %v391 = vsub.f32 %v229, %v359
      %v392 = vsub.f32 %v230, %v360
      %v393 = vsub.f32 %v231, %v361
      %v394 = vsub.f32 %v232, %v362
      %v395 = vsub.f32 %v233, %v363
      %v396 = vsub.f32 %v234, %v364
      %v397 = vsub.f32 %v235, %v365
      %v398 = vsub.f32 %v236, %v366
      %v399 = vsub.f32 %v237, %v367
      %v400 = vsub.f32 %v238, %v368
      %v401 = vsub.f32 %v239, %v369
      %v402 = vsub.f32 %v240, %v370
      %v403 = vsub.f32 %v241, %v371
      %v404 = vsub.f32 %v242, %v372
      %v405 = vsub.f32 %v243, %v373
      %v406 = vsub.f32 %v244, %v374
      %v407 = vsub.f32 %v245, %v375
      %v408 = vsub.f32 %v246, %v376
      %v409 = vsub.f32 %v247, %v377
      %v410 = vsub.f32 %v248, %v378
      %v411 = vsub.f32 %v249, %v379
      %v412 = vsub.f32 %v250, %v380
      %v413 = vsub.f32 %v251, %v381
      %v414 = vsub.f32 %v252, %v382
      %v415 = vsub.f32 %v253, %v383
      %v416 = vsub.f32 %v254, %v384
      %v417 = vsub.f32 %v255, %v385
      %v418 = vsub.f32 %v256, %v386
      %v419 = vsub.f32 %v257, %v387
      %v420 = vsub.f32 %v258, %v388
      %v421 = vsub.f32 %v259, %v389
      %v422 = vsub.f32 %v260, %v390
      %v423 = vmul.f32 %v391, %v391
      %v424 = vmul.f32 %v392, %v392
      %v425 = vmul.f32 %v393, %v393
      %v426 = vmul.f32 %v394, %v394
      %v427 = vmul.f32 %v395, %v395
      %v428 = vmul.f32 %v396, %v396
      %v429 = vmul.f32 %v397, %v397
      %v430 = vmul.f32 %v398, %v398
      %v431 = vmul.f32 %v399, %v399
      %v432 = vmul.f32 %v400, %v400
      %v433 = vmul.f32 %v401, %v401
      %v434 = vmul.f32 %v402, %v402
      %v435 = vmul.f32 %v403, %v403
      %v436 = vmul.f32 %v404, %v404
      %v437 = vmul.f32 %v405, %v405
      %v438 = vmul.f32 %v406, %v406
      %v439 = vmul.f32 %v407, %v407
      %v440 = vmul.f32 %v408, %v408
      %v441 = vmul.f32 %v409, %v409
      %v442 = vmul.f32 %v410, %v410
      %v443 = vmul.f32 %v411, %v411
      %v444 = vmul.f32 %v412, %v412
      %v445 = vmul.f32 %v413, %v413
      %v446 = vmul.f32 %v414, %v414
      %v447 = vmul.f32 %v415, %v415
      %v448 = vmul.f32 %v416, %v416
      %v449 = vmul.f32 %v417, %v417
      %v450 = vmul.f32 %v418, %v418
      %v451 = vmul.f32 %v419, %v419
      %v452 = vmul.f32 %v420, %v420
      %v453 = vmul.f32 %v421, %v421
      %v454 = vmul.f32 %v422, %v422
      %v455 = vsel %vm261, %v423, 0.0
      %456 = vadd.xlane.f32.xlu0 %v455
      %v457 = vpop.xlane.xlu0 %456
      %v458 = vsel %vm261, %v424, 0.0
      %459 = vadd.xlane.f32.xlu0 %v458
      %v460 = vpop.xlane.xlu0 %459
      %v461 = vsel %vm261, %v425, 0.0
      %462 = vadd.xlane.f32.xlu0 %v461
      %v463 = vpop.xlane.xlu0 %462
      %v464 = vsel %vm261, %v426, 0.0
      %465 = vadd.xlane.f32.xlu0 %v464
      %v466 = vpop.xlane.xlu0 %465
      %v467 = vsel %vm261, %v427, 0.0
      %468 = vadd.xlane.f32.xlu0 %v467
      %v469 = vpop.xlane.xlu0 %468
      %v470 = vsel %vm261, %v428, 0.0
      %471 = vadd.xlane.f32.xlu0 %v470
      %v472 = vpop.xlane.xlu0 %471
      %v473 = vsel %vm261, %v429, 0.0
      %474 = vadd.xlane.f32.xlu0 %v473
      %v475 = vpop.xlane.xlu0 %474
      %v476 = vsel %vm261, %v430, 0.0
      %477 = vadd.xlane.f32.xlu0 %v476
      %v478 = vpop.xlane.xlu0 %477
      %v479 = vsel %vm261, %v431, 0.0
      %480 = vadd.xlane.f32.xlu0 %v479
      %v481 = vpop.xlane.xlu0 %480
      %v482 = vsel %vm261, %v432, 0.0
      %483 = vadd.xlane.f32.xlu0 %v482
      %v484 = vpop.xlane.xlu0 %483
      %v485 = vsel %vm261, %v433, 0.0
      %486 = vadd.xlane.f32.xlu0 %v485
      %v487 = vpop.xlane.xlu0 %486
      %v488 = vsel %vm261, %v434, 0.0
      %489 = vadd.xlane.f32.xlu0 %v488
      %v490 = vpop.xlane.xlu0 %489
      %v491 = vsel %vm261, %v435, 0.0
      %492 = vadd.xlane.f32.xlu0 %v491
      %v493 = vpop.xlane.xlu0 %492
      %v494 = vsel %vm261, %v436, 0.0
      %495 = vadd.xlane.f32.xlu0 %v494
      %v496 = vpop.xlane.xlu0 %495
      %v497 = vsel %vm261, %v437, 0.0
      %498 = vadd.xlane.f32.xlu0 %v497
      %v499 = vpop.xlane.xlu0 %498
      %v500 = vsel %vm261, %v438, 0.0
      %501 = vadd.xlane.f32.xlu0 %v500
      %v502 = vpop.xlane.xlu0 %501
      %v503 = vsel %vm261, %v439, 0.0
      %504 = vadd.xlane.f32.xlu0 %v503
      %v505 = vpop.xlane.xlu0 %504
      %v506 = vsel %vm261, %v440, 0.0
      %507 = vadd.xlane.f32.xlu0 %v506
      %v508 = vpop.xlane.xlu0 %507
      %v509 = vsel %vm261, %v441, 0.0
      %510 = vadd.xlane.f32.xlu0 %v509
      %v511 = vpop.xlane.xlu0 %510
      %v512 = vsel %vm261, %v442, 0.0
      %513 = vadd.xlane.f32.xlu0 %v512
      %v514 = vpop.xlane.xlu0 %513
      %v515 = vsel %vm261, %v443, 0.0
      %516 = vadd.xlane.f32.xlu0 %v515
      %v517 = vpop.xlane.xlu0 %516
      %v518 = vsel %vm261, %v444, 0.0
      %519 = vadd.xlane.f32.xlu0 %v518
      %v520 = vpop.xlane.xlu0 %519
      %v521 = vsel %vm261, %v445, 0.0
      %522 = vadd.xlane.f32.xlu0 %v521
      %v523 = vpop.xlane.xlu0 %522
      %v524 = vsel %vm261, %v446, 0.0
      %525 = vadd.xlane.f32.xlu0 %v524
      %v526 = vpop.xlane.xlu0 %525
      %v527 = vsel %vm261, %v447, 0.0
      %528 = vadd.xlane.f32.xlu0 %v527
      %v529 = vpop.xlane.xlu0 %528
      %v530 = vsel %vm261, %v448, 0.0
      %531 = vadd.xlane.f32.xlu0 %v530
      %v532 = vpop.xlane.xlu0 %531
      %v533 = vsel %vm261, %v449, 0.0
      %534 = vadd.xlane.f32.xlu0 %v533
      %v535 = vpop.xlane.xlu0 %534
      %v536 = vsel %vm261, %v450, 0.0
      %537 = vadd.xlane.f32.xlu0 %v536
      %v538 = vpop.xlane.xlu0 %537
      %v539 = vsel %vm261, %v451, 0.0
      %540 = vadd.xlane.f32.xlu0 %v539
      %v541 = vpop.xlane.xlu0 %540
      %v542 = vsel %vm261, %v452, 0.0
      %543 = vadd.xlane.f32.xlu0 %v542
      %v544 = vpop.xlane.xlu0 %543
      %v545 = vsel %vm261, %v453, 0.0
      %546 = vadd.xlane.f32.xlu0 %v545
      %v547 = vpop.xlane.xlu0 %546
      %v548 = vsel %vm261, %v454, 0.0
      %549 = vadd.xlane.f32.xlu0 %v548
      %v550 = vpop.xlane.xlu0 %549
      %v551 = vmul.f32 %v457, %v358
      %v552 = vmul.f32 %v460, %v358
      %v553 = vmul.f32 %v463, %v358
      %v554 = vmul.f32 %v466, %v358
      %v555 = vmul.f32 %v469, %v358
      %v556 = vmul.f32 %v472, %v358
      %v557 = vmul.f32 %v475, %v358
      %v558 = vmul.f32 %v478, %v358
      %v559 = vmul.f32 %v481, %v358
      %v560 = vmul.f32 %v484, %v358
      %v561 = vmul.f32 %v487, %v358
      %v562 = vmul.f32 %v490, %v358
      %v563 = vmul.f32 %v493, %v358
      %v564 = vmul.f32 %v496, %v358
      %v565 = vmul.f32 %v499, %v358
      %v566 = vmul.f32 %v502, %v358
      %v567 = vmul.f32 %v505, %v358
      %v568 = vmul.f32 %v508, %v358
      %v569 = vmul.f32 %v511, %v358
      %v570 = vmul.f32 %v514, %v358
      %v571 = vmul.f32 %v517, %v358
      %v572 = vmul.f32 %v520, %v358
      %v573 = vmul.f32 %v523, %v358
      %v574 = vmul.f32 %v526, %v358
      %v575 = vmul.f32 %v529, %v358
      %v576 = vmul.f32 %v532, %v358
      %v577 = vmul.f32 %v535, %v358
      %v578 = vmul.f32 %v538, %v358
      %v579 = vmul.f32 %v541, %v358
      %v580 = vmul.f32 %v544, %v358
      %v581 = vmul.f32 %v547, %v358
      %v582 = vmul.f32 %v550, %v358
      %v583 = vadd.f32 %v551, 1e-05
      %v584 = vadd.f32 %v552, 1e-05
      %v585 = vadd.f32 %v553, 1e-05
      %v586 = vadd.f32 %v554, 1e-05
      %v587 = vadd.f32 %v555, 1e-05
      %v588 = vadd.f32 %v556, 1e-05
      %v589 = vadd.f32 %v557, 1e-05
      %v590 = vadd.f32 %v558, 1e-05
      %v591 = vadd.f32 %v559, 1e-05
      %v592 = vadd.f32 %v560, 1e-05
      %v593 = vadd.f32 %v561, 1e-05
      %v594 = vadd.f32 %v562, 1e-05
      %v595 = vadd.f32 %v563, 1e-05
      %v596 = vadd.f32 %v564, 1e-05
      %v597 = vadd.f32 %v565, 1e-05
      %v598 = vadd.f32 %v566, 1e-05
      %v599 = vadd.f32 %v567, 1e-05
      %v600 = vadd.f32 %v568, 1e-05
      %v601 = vadd.f32 %v569, 1e-05
      %v602 = vadd.f32 %v570, 1e-05
      %v603 = vadd.f32 %v571, 1e-05
      %v604 = vadd.f32 %v572, 1e-05
      %v605 = vadd.f32 %v573, 1e-05
      %v606 = vadd.f32 %v574, 1e-05
      %v607 = vadd.f32 %v575, 1e-05
      %v608 = vadd.f32 %v576, 1e-05
      %v609 = vadd.f32 %v577, 1e-05
      %v610 = vadd.f32 %v578, 1e-05
      %v611 = vadd.f32 %v579, 1e-05
      %v612 = vadd.f32 %v580, 1e-05
      %v613 = vadd.f32 %v581, 1e-05
      %v614 = vadd.f32 %v582, 1e-05
      %v615 = vrsqrt.pop %v583
      %v616 = vrsqrt.pop %v584
      %v617 = vrsqrt.pop %v585
      %v618 = vrsqrt.pop %v586
      %v619 = vrsqrt.pop %v587
      %v620 = vrsqrt.pop %v588
      %v621 = vrsqrt.pop %v589
      %v622 = vrsqrt.pop %v590
      %v623 = vrsqrt.pop %v591
      %v624 = vrsqrt.pop %v592
      %v625 = vrsqrt.pop %v593
      %v626 = vrsqrt.pop %v594
      %v627 = vrsqrt.pop %v595
      %v628 = vrsqrt.pop %v596
      %v629 = vrsqrt.pop %v597
      %v630 = vrsqrt.pop %v598
      %v631 = vrsqrt.pop %v599
      %v632 = vrsqrt.pop %v600
      %v633 = vrsqrt.pop %v601
      %v634 = vrsqrt.pop %v602
      %v635 = vrsqrt.pop %v603
      %v636 = vrsqrt.pop %v604
      %v637 = vrsqrt.pop %v605
      %v638 = vrsqrt.pop %v606
      %v639 = vrsqrt.pop %v607
      %v640 = vrsqrt.pop %v608
      %v641 = vrsqrt.pop %v609
      %v642 = vrsqrt.pop %v610
      %v643 = vrsqrt.pop %v611
      %v644 = vrsqrt.pop %v612
      %v645 = vrsqrt.pop %v613
      %v646 = vrsqrt.pop %v614
      %v647 = vlaneseq
      %v648 = vshrl.u32 %v647, 7
      %v649 = vsub.s32 0, %v648
      %v650 = vrot.slane %v224, %v649
      %v651 = vmul.f32 %v650, %v615
      %v652 = vmul.f32 %v650, %v616
      %v653 = vmul.f32 %v650, %v617
      %v654 = vmul.f32 %v650, %v618
      %v655 = vmul.f32 %v650, %v619
      %v656 = vmul.f32 %v650, %v620
      %v657 = vmul.f32 %v650, %v621
      %v658 = vmul.f32 %v650, %v622
      %v659 = vmul.f32 %v650, %v623
      %v660 = vmul.f32 %v650, %v624
      %v661 = vmul.f32 %v650, %v625
      %v662 = vmul.f32 %v650, %v626
      %v663 = vmul.f32 %v650, %v627
      %v664 = vmul.f32 %v650, %v628
      %v665 = vmul.f32 %v650, %v629
      %v666 = vmul.f32 %v650, %v630
      %v667 = vmul.f32 %v650, %v631
      %v668 = vmul.f32 %v650, %v632
      %v669 = vmul.f32 %v650, %v633
      %v670 = vmul.f32 %v650, %v634
      %v671 = vmul.f32 %v650, %v635
      %v672 = vmul.f32 %v650, %v636
      %v673 = vmul.f32 %v650, %v637
      %v674 = vmul.f32 %v650, %v638
      %v675 = vmul.f32 %v650, %v639
      %v676 = vmul.f32 %v650, %v640
      %v677 = vmul.f32 %v650, %v641
      %v678 = vmul.f32 %v650, %v642
      %v679 = vmul.f32 %v650, %v643
      %v680 = vmul.f32 %v650, %v644
      %v681 = vmul.f32 %v650, %v645
      %v682 = vmul.f32 %v650, %v646
      %v683 = vmul.f32 %v391, %v651
      %v684 = vmul.f32 %v392, %v652
      %v685 = vmul.f32 %v393, %v653
      %v686 = vmul.f32 %v394, %v654
      %v687 = vmul.f32 %v395, %v655
      %v688 = vmul.f32 %v396, %v656
      %v689 = vmul.f32 %v397, %v657
      %v690 = vmul.f32 %v398, %v658
      %v691 = vmul.f32 %v399, %v659
      %v692 = vmul.f32 %v400, %v660
      %v693 = vmul.f32 %v401, %v661
      %v694 = vmul.f32 %v402, %v662
      %v695 = vmul.f32 %v403, %v663
      %v696 = vmul.f32 %v404, %v664
      %v697 = vmul.f32 %v405, %v665
      %v698 = vmul.f32 %v406, %v666
      %v699 = vmul.f32 %v407, %v667
      %v700 = vmul.f32 %v408, %v668
      %v701 = vmul.f32 %v409, %v669
      %v702 = vmul.f32 %v410, %v670
      %v703 = vmul.f32 %v411, %v671
      %v704 = vmul.f32 %v412, %v672
      %v705 = vmul.f32 %v413, %v673
      %v706 = vmul.f32 %v414, %v674
      %v707 = vmul.f32 %v415, %v675
      %v708 = vmul.f32 %v416, %v676
      %v709 = vmul.f32 %v417, %v677
      %v710 = vmul.f32 %v418, %v678
      %v711 = vmul.f32 %v419, %v679
      %v712 = vmul.f32 %v420, %v680
      %v713 = vmul.f32 %v421, %v681
      %v714 = vmul.f32 %v422, %v682
      %v715 = vlaneseq
      %v716 = vshrl.u32 %v715, 7
      %v717 = vsub.s32 0, %v716
      %v718 = vrot.slane %v225, %v717
      %v719 = vadd.f32 %v683, %v718
      %v720 = vadd.f32 %v684, %v718
      %v721 = vadd.f32 %v685, %v718
      %v722 = vadd.f32 %v686, %v718
      %v723 = vadd.f32 %v687, %v718
      %v724 = vadd.f32 %v688, %v718
      %v725 = vadd.f32 %v689, %v718
      %v726 = vadd.f32 %v690, %v718
      %v727 = vadd.f32 %v691, %v718
      %v728 = vadd.f32 %v692, %v718
      %v729 = vadd.f32 %v693, %v718
      %v730 = vadd.f32 %v694, %v718
      %v731 = vadd.f32 %v695, %v718
      %v732 = vadd.f32 %v696, %v718
      %v733 = vadd.f32 %v697, %v718
      %v734 = vadd.f32 %v698, %v718
      %v735 = vadd.f32 %v699, %v718
      %v736 = vadd.f32 %v700, %v718
      %v737 = vadd.f32 %v701, %v718
      %v738 = vadd.f32 %v702, %v718
      %v739 = vadd.f32 %v703, %v718
      %v740 = vadd.f32 %v704, %v718
      %v741 = vadd.f32 %v705, %v718
      %v742 = vadd.f32 %v706, %v718
      %v743 = vadd.f32 %v707, %v718
      %v744 = vadd.f32 %v708, %v718
      %v745 = vadd.f32 %v709, %v718
      %v746 = vadd.f32 %v710, %v718
      %v747 = vadd.f32 %v711, %v718
      %v748 = vadd.f32 %v712, %v718
      %v749 = vadd.f32 %v713, %v718
      %v750 = vadd.f32 %v714, %v718
      %v751 = vld [vmem:[%s215] sm:$0xff]
      %v752 = vld [vmem:[%s215 + $0x8] sm:$0xff]
      %v753 = vld [vmem:[%s215 + $0x10] sm:$0xff]
      %v754 = vld [vmem:[%s215 + $0x18] sm:$0xff]
      %v755 = vld [vmem:[%s215 + $0x20] sm:$0xff]
      %v756 = vld [vmem:[%s215 + $0x28] sm:$0xff]
      %v757 = vld [vmem:[%s215 + $0x30] sm:$0xff]
      %v758 = vld [vmem:[%s215 + $0x38] sm:$0xff]
      %v759 = vld [vmem:[%s215 + $0x40] sm:$0xff]
      %v760 = vld [vmem:[%s215 + $0x48] sm:$0xff]
      %v761 = vld [vmem:[%s215 + $0x50] sm:$0xff]
      %v762 = vld [vmem:[%s215 + $0x58] sm:$0xff]
      %v763 = vld [vmem:[%s215 + $0x60] sm:$0xff]
      %v764 = vld [vmem:[%s215 + $0x68] sm:$0xff]
      %v765 = vld [vmem:[%s215 + $0x70] sm:$0xff]
      %v766 = vld [vmem:[%s215 + $0x78] sm:$0xff]
      %v767 = vld [vmem:[%s215 + $0x80] sm:$0xff]
      %v768 = vld [vmem:[%s215 + $0x88] sm:$0xff]
      %v769 = vld [vmem:[%s215 + $0x90] sm:$0xff]
      %v770 = vld [vmem:[%s215 + $0x98] sm:$0xff]
      %v771 = vld [vmem:[%s215 + $0xa0] sm:$0xff]
      %v772 = vld [vmem:[%s215 + $0xa8] sm:$0xff]
      %v773 = vld [vmem:[%s215 + $0xb0] sm:$0xff]
      %v774 = vld [vmem:[%s215 + $0xb8] sm:$0xff]
      %v775 = vld [vmem:[%s215 + $0xc0] sm:$0xff]
      %v776 = vld [vmem:[%s215 + $0xc8] sm:$0xff]
      %v777 = vld [vmem:[%s215 + $0xd0] sm:$0xff]
      %v778 = vld [vmem:[%s215 + $0xd8] sm:$0xff]
      %v779 = vld [vmem:[%s215 + $0xe0] sm:$0xff]
      %v780 = vld [vmem:[%s215 + $0xe8] sm:$0xff]
      %v781 = vld [vmem:[%s215 + $0xf0] sm:$0xff]
      %v782 = vld [vmem:[%s215 + $0xf8] sm:$0xff]
      %vm783 = vcmask 130048
      %v784 = vsel %vm783, %v751, 0.0
      %785 = vadd.xlane.f32.xlu0 %v784
      %v786 = vpop.xlane.xlu0 %785
      %v787 = vsel %vm783, %v752, 0.0
      %788 = vadd.xlane.f32.xlu0 %v787
      %v789 = vpop.xlane.xlu0 %788
      %v790 = vsel %vm783, %v753, 0.0
      %791 = vadd.xlane.f32.xlu0 %v790
      %v792 = vpop.xlane.xlu0 %791
      %v793 = vsel %vm783, %v754, 0.0
      %794 = vadd.xlane.f32.xlu0 %v793
      %v795 = vpop.xlane.xlu0 %794
      %v796 = vsel %vm783, %v755, 0.0
      %797 = vadd.xlane.f32.xlu0 %v796
      %v798 = vpop.xlane.xlu0 %797
      %v799 = vsel %vm783, %v756, 0.0
      %800 = vadd.xlane.f32.xlu0 %v799
      %v801 = vpop.xlane.xlu0 %800
      %v802 = vsel %vm783, %v757, 0.0
      %803 = vadd.xlane.f32.xlu0 %v802
      %v804 = vpop.xlane.xlu0 %803
      %v805 = vsel %vm783, %v758, 0.0
      %806 = vadd.xlane.f32.xlu0 %v805
      %v807 = vpop.xlane.xlu0 %806
      %v808 = vsel %vm783, %v759, 0.0
      %809 = vadd.xlane.f32.xlu0 %v808
      %v810 = vpop.xlane.xlu0 %809
      %v811 = vsel %vm783, %v760, 0.0
      %812 = vadd.xlane.f32.xlu0 %v811
      %v813 = vpop.xlane.xlu0 %812
      %v814 = vsel %vm783, %v761, 0.0
      %815 = vadd.xlane.f32.xlu0 %v814
      %v816 = vpop.xlane.xlu0 %815
      %v817 = vsel %vm783, %v762, 0.0
      %818 = vadd.xlane.f32.xlu0 %v817
      %v819 = vpop.xlane.xlu0 %818
      %v820 = vsel %vm783, %v763, 0.0
      %821 = vadd.xlane.f32.xlu0 %v820
      %v822 = vpop.xlane.xlu0 %821
      %v823 = vsel %vm783, %v764, 0.0
      %824 = vadd.xlane.f32.xlu0 %v823
      %v825 = vpop.xlane.xlu0 %824
      %v826 = vsel %vm783, %v765, 0.0
      %827 = vadd.xlane.f32.xlu0 %v826
      %v828 = vpop.xlane.xlu0 %827
      %v829 = vsel %vm783, %v766, 0.0
      %830 = vadd.xlane.f32.xlu0 %v829
      %v831 = vpop.xlane.xlu0 %830
      %v832 = vsel %vm783, %v767, 0.0
      %833 = vadd.xlane.f32.xlu0 %v832
      %v834 = vpop.xlane.xlu0 %833
      %v835 = vsel %vm783, %v768, 0.0
      %836 = vadd.xlane.f32.xlu0 %v835
      %v837 = vpop.xlane.xlu0 %836
      %v838 = vsel %vm783, %v769, 0.0
      %839 = vadd.xlane.f32.xlu0 %v838
      %v840 = vpop.xlane.xlu0 %839
      %v841 = vsel %vm783, %v770, 0.0
      %842 = vadd.xlane.f32.xlu0 %v841
      %v843 = vpop.xlane.xlu0 %842
      %v844 = vsel %vm783, %v771, 0.0
      %845 = vadd.xlane.f32.xlu0 %v844
      %v846 = vpop.xlane.xlu0 %845
      %v847 = vsel %vm783, %v772, 0.0
      %848 = vadd.xlane.f32.xlu0 %v847
      %v849 = vpop.xlane.xlu0 %848
      %v850 = vsel %vm783, %v773, 0.0
      %851 = vadd.xlane.f32.xlu0 %v850
      %v852 = vpop.xlane.xlu0 %851
      %v853 = vsel %vm783, %v774, 0.0
      %854 = vadd.xlane.f32.xlu0 %v853
      %v855 = vpop.xlane.xlu0 %854
      %v856 = vsel %vm783, %v775, 0.0
      %857 = vadd.xlane.f32.xlu0 %v856
      %v858 = vpop.xlane.xlu0 %857
      %v859 = vsel %vm783, %v776, 0.0
      %860 = vadd.xlane.f32.xlu0 %v859
      %v861 = vpop.xlane.xlu0 %860
      %v862 = vsel %vm783, %v777, 0.0
      %863 = vadd.xlane.f32.xlu0 %v862
      %v864 = vpop.xlane.xlu0 %863
      %v865 = vsel %vm783, %v778, 0.0
      %866 = vadd.xlane.f32.xlu0 %v865
      %v867 = vpop.xlane.xlu0 %866
      %v868 = vsel %vm783, %v779, 0.0
      %869 = vadd.xlane.f32.xlu0 %v868
      %v870 = vpop.xlane.xlu0 %869
      %v871 = vsel %vm783, %v780, 0.0
      %872 = vadd.xlane.f32.xlu0 %v871
      %v873 = vpop.xlane.xlu0 %872
      %v874 = vsel %vm783, %v781, 0.0
      %875 = vadd.xlane.f32.xlu0 %v874
      %v876 = vpop.xlane.xlu0 %875
      %v877 = vsel %vm783, %v782, 0.0
      %878 = vadd.xlane.f32.xlu0 %v877
      %v879 = vpop.xlane.xlu0 %878
      %v880 = vrcp.pop 16.0
      %v881 = vmul.f32 %v786, %v880
      %v882 = vmul.f32 %v789, %v880
      %v883 = vmul.f32 %v792, %v880
      %v884 = vmul.f32 %v795, %v880
      %v885 = vmul.f32 %v798, %v880
      %v886 = vmul.f32 %v801, %v880
      %v887 = vmul.f32 %v804, %v880
      %v888 = vmul.f32 %v807, %v880
      %v889 = vmul.f32 %v810, %v880
      %v890 = vmul.f32 %v813, %v880
      %v891 = vmul.f32 %v816, %v880
      %v892 = vmul.f32 %v819, %v880
      %v893 = vmul.f32 %v822, %v880
      %v894 = vmul.f32 %v825, %v880
      %v895 = vmul.f32 %v828, %v880
      %v896 = vmul.f32 %v831, %v880
      %v897 = vmul.f32 %v834, %v880
      %v898 = vmul.f32 %v837, %v880
      %v899 = vmul.f32 %v840, %v880
      %v900 = vmul.f32 %v843, %v880
      %v901 = vmul.f32 %v846, %v880
      %v902 = vmul.f32 %v849, %v880
      %v903 = vmul.f32 %v852, %v880
      %v904 = vmul.f32 %v855, %v880
      %v905 = vmul.f32 %v858, %v880
      %v906 = vmul.f32 %v861, %v880
      %v907 = vmul.f32 %v864, %v880
      %v908 = vmul.f32 %v867, %v880
      %v909 = vmul.f32 %v870, %v880
      %v910 = vmul.f32 %v873, %v880
      %v911 = vmul.f32 %v876, %v880
      %v912 = vmul.f32 %v879, %v880
      %v913 = vsub.f32 %v751, %v881
      %v914 = vsub.f32 %v752, %v882
      %v915 = vsub.f32 %v753, %v883
      %v916 = vsub.f32 %v754, %v884
      %v917 = vsub.f32 %v755, %v885
      %v918 = vsub.f32 %v756, %v886
      %v919 = vsub.f32 %v757, %v887
      %v920 = vsub.f32 %v758, %v888
      %v921 = vsub.f32 %v759, %v889
      %v922 = vsub.f32 %v760, %v890
      %v923 = vsub.f32 %v761, %v891
      %v924 = vsub.f32 %v762, %v892
      %v925 = vsub.f32 %v763, %v893
      %v926 = vsub.f32 %v764, %v894
      %v927 = vsub.f32 %v765, %v895
      %v928 = vsub.f32 %v766, %v896
      %v929 = vsub.f32 %v767, %v897
      %v930 = vsub.f32 %v768, %v898
      %v931 = vsub.f32 %v769, %v899
      %v932 = vsub.f32 %v770, %v900
      %v933 = vsub.f32 %v771, %v901
      %v934 = vsub.f32 %v772, %v902
      %v935 = vsub.f32 %v773, %v903
      %v936 = vsub.f32 %v774, %v904
      %v937 = vsub.f32 %v775, %v905
      %v938 = vsub.f32 %v776, %v906
      %v939 = vsub.f32 %v777, %v907
      %v940 = vsub.f32 %v778, %v908
      %v941 = vsub.f32 %v779, %v909
      %v942 = vsub.f32 %v780, %v910
      %v943 = vsub.f32 %v781, %v911
      %v944 = vsub.f32 %v782, %v912
      %v945 = vmul.f32 %v913, %v913
      %v946 = vmul.f32 %v914, %v914
      %v947 = vmul.f32 %v915, %v915
      %v948 = vmul.f32 %v916, %v916
      %v949 = vmul.f32 %v917, %v917
      %v950 = vmul.f32 %v918, %v918
      %v951 = vmul.f32 %v919, %v919
      %v952 = vmul.f32 %v920, %v920
      %v953 = vmul.f32 %v921, %v921
      %v954 = vmul.f32 %v922, %v922
      %v955 = vmul.f32 %v923, %v923
      %v956 = vmul.f32 %v924, %v924
      %v957 = vmul.f32 %v925, %v925
      %v958 = vmul.f32 %v926, %v926
      %v959 = vmul.f32 %v927, %v927
      %v960 = vmul.f32 %v928, %v928
      %v961 = vmul.f32 %v929, %v929
      %v962 = vmul.f32 %v930, %v930
      %v963 = vmul.f32 %v931, %v931
      %v964 = vmul.f32 %v932, %v932
      %v965 = vmul.f32 %v933, %v933
      %v966 = vmul.f32 %v934, %v934
      %v967 = vmul.f32 %v935, %v935
      %v968 = vmul.f32 %v936, %v936
      %v969 = vmul.f32 %v937, %v937
      %v970 = vmul.f32 %v938, %v938
      %v971 = vmul.f32 %v939, %v939
      %v972 = vmul.f32 %v940, %v940
      %v973 = vmul.f32 %v941, %v941
      %v974 = vmul.f32 %v942, %v942
      %v975 = vmul.f32 %v943, %v943
      %v976 = vmul.f32 %v944, %v944
      %v977 = vsel %vm783, %v945, 0.0
      %978 = vadd.xlane.f32.xlu0 %v977
      %v979 = vpop.xlane.xlu0 %978
      %v980 = vsel %vm783, %v946, 0.0
      %981 = vadd.xlane.f32.xlu0 %v980
      %v982 = vpop.xlane.xlu0 %981
      %v983 = vsel %vm783, %v947, 0.0
      %984 = vadd.xlane.f32.xlu0 %v983
      %v985 = vpop.xlane.xlu0 %984
      %v986 = vsel %vm783, %v948, 0.0
      %987 = vadd.xlane.f32.xlu0 %v986
      %v988 = vpop.xlane.xlu0 %987
      %v989 = vsel %vm783, %v949, 0.0
      %990 = vadd.xlane.f32.xlu0 %v989
      %v991 = vpop.xlane.xlu0 %990
      %v992 = vsel %vm783, %v950, 0.0
      %993 = vadd.xlane.f32.xlu0 %v992
      %v994 = vpop.xlane.xlu0 %993
      %v995 = vsel %vm783, %v951, 0.0
      %996 = vadd.xlane.f32.xlu0 %v995
      %v997 = vpop.xlane.xlu0 %996
      %v998 = vsel %vm783, %v952, 0.0
      %999 = vadd.xlane.f32.xlu0 %v998
      %v1000 = vpop.xlane.xlu0 %999
      %v1001 = vsel %vm783, %v953, 0.0
      %1002 = vadd.xlane.f32.xlu0 %v1001
      %v1003 = vpop.xlane.xlu0 %1002
      %v1004 = vsel %vm783, %v954, 0.0
      %1005 = vadd.xlane.f32.xlu0 %v1004
      %v1006 = vpop.xlane.xlu0 %1005
      %v1007 = vsel %vm783, %v955, 0.0
      %1008 = vadd.xlane.f32.xlu0 %v1007
      %v1009 = vpop.xlane.xlu0 %1008
      %v1010 = vsel %vm783, %v956, 0.0
      %1011 = vadd.xlane.f32.xlu0 %v1010
      %v1012 = vpop.xlane.xlu0 %1011
      %v1013 = vsel %vm783, %v957, 0.0
      %1014 = vadd.xlane.f32.xlu0 %v1013
      %v1015 = vpop.xlane.xlu0 %1014
      %v1016 = vsel %vm783, %v958, 0.0
      %1017 = vadd.xlane.f32.xlu0 %v1016
      %v1018 = vpop.xlane.xlu0 %1017
      %v1019 = vsel %vm783, %v959, 0.0
      %1020 = vadd.xlane.f32.xlu0 %v1019
      %v1021 = vpop.xlane.xlu0 %1020
      %v1022 = vsel %vm783, %v960, 0.0
      %1023 = vadd.xlane.f32.xlu0 %v1022
      %v1024 = vpop.xlane.xlu0 %1023
      %v1025 = vsel %vm783, %v961, 0.0
      %1026 = vadd.xlane.f32.xlu0 %v1025
      %v1027 = vpop.xlane.xlu0 %1026
      %v1028 = vsel %vm783, %v962, 0.0
      %1029 = vadd.xlane.f32.xlu0 %v1028
      %v1030 = vpop.xlane.xlu0 %1029
      %v1031 = vsel %vm783, %v963, 0.0
      %1032 = vadd.xlane.f32.xlu0 %v1031
      %v1033 = vpop.xlane.xlu0 %1032
      %v1034 = vsel %vm783, %v964, 0.0
      %1035 = vadd.xlane.f32.xlu0 %v1034
      %v1036 = vpop.xlane.xlu0 %1035
      %v1037 = vsel %vm783, %v965, 0.0
      %1038 = vadd.xlane.f32.xlu0 %v1037
      %v1039 = vpop.xlane.xlu0 %1038
      %v1040 = vsel %vm783, %v966, 0.0
      %1041 = vadd.xlane.f32.xlu0 %v1040
      %v1042 = vpop.xlane.xlu0 %1041
      %v1043 = vsel %vm783, %v967, 0.0
      %1044 = vadd.xlane.f32.xlu0 %v1043
      %v1045 = vpop.xlane.xlu0 %1044
      %v1046 = vsel %vm783, %v968, 0.0
      %1047 = vadd.xlane.f32.xlu0 %v1046
      %v1048 = vpop.xlane.xlu0 %1047
      %v1049 = vsel %vm783, %v969, 0.0
      %1050 = vadd.xlane.f32.xlu0 %v1049
      %v1051 = vpop.xlane.xlu0 %1050
      %v1052 = vsel %vm783, %v970, 0.0
      %1053 = vadd.xlane.f32.xlu0 %v1052
      %v1054 = vpop.xlane.xlu0 %1053
      %v1055 = vsel %vm783, %v971, 0.0
      %1056 = vadd.xlane.f32.xlu0 %v1055
      %v1057 = vpop.xlane.xlu0 %1056
      %v1058 = vsel %vm783, %v972, 0.0
      %1059 = vadd.xlane.f32.xlu0 %v1058
      %v1060 = vpop.xlane.xlu0 %1059
      %v1061 = vsel %vm783, %v973, 0.0
      %1062 = vadd.xlane.f32.xlu0 %v1061
      %v1063 = vpop.xlane.xlu0 %1062
      %v1064 = vsel %vm783, %v974, 0.0
      %1065 = vadd.xlane.f32.xlu0 %v1064
      %v1066 = vpop.xlane.xlu0 %1065
      %v1067 = vsel %vm783, %v975, 0.0
      %1068 = vadd.xlane.f32.xlu0 %v1067
      %v1069 = vpop.xlane.xlu0 %1068
      %v1070 = vsel %vm783, %v976, 0.0
      %1071 = vadd.xlane.f32.xlu0 %v1070
      %v1072 = vpop.xlane.xlu0 %1071
      %v1073 = vmul.f32 %v979, %v880
      %v1074 = vmul.f32 %v982, %v880
      %v1075 = vmul.f32 %v985, %v880
      %v1076 = vmul.f32 %v988, %v880
      %v1077 = vmul.f32 %v991, %v880
      %v1078 = vmul.f32 %v994, %v880
      %v1079 = vmul.f32 %v997, %v880
      %v1080 = vmul.f32 %v1000, %v880
      %v1081 = vmul.f32 %v1003, %v880
      %v1082 = vmul.f32 %v1006, %v880
      %v1083 = vmul.f32 %v1009, %v880
      %v1084 = vmul.f32 %v1012, %v880
      %v1085 = vmul.f32 %v1015, %v880
      %v1086 = vmul.f32 %v1018, %v880
      %v1087 = vmul.f32 %v1021, %v880
      %v1088 = vmul.f32 %v1024, %v880
      %v1089 = vmul.f32 %v1027, %v880
      %v1090 = vmul.f32 %v1030, %v880
      %v1091 = vmul.f32 %v1033, %v880
      %v1092 = vmul.f32 %v1036, %v880
      %v1093 = vmul.f32 %v1039, %v880
      %v1094 = vmul.f32 %v1042, %v880
      %v1095 = vmul.f32 %v1045, %v880
      %v1096 = vmul.f32 %v1048, %v880
      %v1097 = vmul.f32 %v1051, %v880
      %v1098 = vmul.f32 %v1054, %v880
      %v1099 = vmul.f32 %v1057, %v880
      %v1100 = vmul.f32 %v1060, %v880
      %v1101 = vmul.f32 %v1063, %v880
      %v1102 = vmul.f32 %v1066, %v880
      %v1103 = vmul.f32 %v1069, %v880
      %v1104 = vmul.f32 %v1072, %v880
      %v1105 = vadd.f32 %v1073, 1e-05
      %v1106 = vadd.f32 %v1074, 1e-05
      %v1107 = vadd.f32 %v1075, 1e-05
      %v1108 = vadd.f32 %v1076, 1e-05
      %v1109 = vadd.f32 %v1077, 1e-05
      %v1110 = vadd.f32 %v1078, 1e-05
      %v1111 = vadd.f32 %v1079, 1e-05
      %v1112 = vadd.f32 %v1080, 1e-05
      %v1113 = vadd.f32 %v1081, 1e-05
      %v1114 = vadd.f32 %v1082, 1e-05
      %v1115 = vadd.f32 %v1083, 1e-05
      %v1116 = vadd.f32 %v1084, 1e-05
      %v1117 = vadd.f32 %v1085, 1e-05
      %v1118 = vadd.f32 %v1086, 1e-05
      %v1119 = vadd.f32 %v1087, 1e-05
      %v1120 = vadd.f32 %v1088, 1e-05
      %v1121 = vadd.f32 %v1089, 1e-05
      %v1122 = vadd.f32 %v1090, 1e-05
      %v1123 = vadd.f32 %v1091, 1e-05
      %v1124 = vadd.f32 %v1092, 1e-05
      %v1125 = vadd.f32 %v1093, 1e-05
      %v1126 = vadd.f32 %v1094, 1e-05
      %v1127 = vadd.f32 %v1095, 1e-05
      %v1128 = vadd.f32 %v1096, 1e-05
      %v1129 = vadd.f32 %v1097, 1e-05
      %v1130 = vadd.f32 %v1098, 1e-05
      %v1131 = vadd.f32 %v1099, 1e-05
      %v1132 = vadd.f32 %v1100, 1e-05
      %v1133 = vadd.f32 %v1101, 1e-05
      %v1134 = vadd.f32 %v1102, 1e-05
      %v1135 = vadd.f32 %v1103, 1e-05
      %v1136 = vadd.f32 %v1104, 1e-05
      %v1137 = vrsqrt.pop %v1105
      %v1138 = vrsqrt.pop %v1106
      %v1139 = vrsqrt.pop %v1107
      %v1140 = vrsqrt.pop %v1108
      %v1141 = vrsqrt.pop %v1109
      %v1142 = vrsqrt.pop %v1110
      %v1143 = vrsqrt.pop %v1111
      %v1144 = vrsqrt.pop %v1112
      %v1145 = vrsqrt.pop %v1113
      %v1146 = vrsqrt.pop %v1114
      %v1147 = vrsqrt.pop %v1115
      %v1148 = vrsqrt.pop %v1116
      %v1149 = vrsqrt.pop %v1117
      %v1150 = vrsqrt.pop %v1118
      %v1151 = vrsqrt.pop %v1119
      %v1152 = vrsqrt.pop %v1120
      %v1153 = vrsqrt.pop %v1121
      %v1154 = vrsqrt.pop %v1122
      %v1155 = vrsqrt.pop %v1123
      %v1156 = vrsqrt.pop %v1124
      %v1157 = vrsqrt.pop %v1125
      %v1158 = vrsqrt.pop %v1126
      %v1159 = vrsqrt.pop %v1127
      %v1160 = vrsqrt.pop %v1128
      %v1161 = vrsqrt.pop %v1129
      %v1162 = vrsqrt.pop %v1130
      %v1163 = vrsqrt.pop %v1131
      %v1164 = vrsqrt.pop %v1132
      %v1165 = vrsqrt.pop %v1133
      %v1166 = vrsqrt.pop %v1134
      %v1167 = vrsqrt.pop %v1135
      %v1168 = vrsqrt.pop %v1136
      %v1169 = vlaneseq
      %v1170 = vshrl.u32 %v1169, 7
      %v1171 = vsub.s32 0, %v1170
      %v1172 = vrot.slane %v226, %v1171
      %v1173 = vmul.f32 %v1172, %v1137
      %v1174 = vmul.f32 %v1172, %v1138
      %v1175 = vmul.f32 %v1172, %v1139
      %v1176 = vmul.f32 %v1172, %v1140
      %v1177 = vmul.f32 %v1172, %v1141
      %v1178 = vmul.f32 %v1172, %v1142
      %v1179 = vmul.f32 %v1172, %v1143
      %v1180 = vmul.f32 %v1172, %v1144
      %v1181 = vmul.f32 %v1172, %v1145
      %v1182 = vmul.f32 %v1172, %v1146
      %v1183 = vmul.f32 %v1172, %v1147
      %v1184 = vmul.f32 %v1172, %v1148
      %v1185 = vmul.f32 %v1172, %v1149
      %v1186 = vmul.f32 %v1172, %v1150
      %v1187 = vmul.f32 %v1172, %v1151
      %v1188 = vmul.f32 %v1172, %v1152
      %v1189 = vmul.f32 %v1172, %v1153
      %v1190 = vmul.f32 %v1172, %v1154
      %v1191 = vmul.f32 %v1172, %v1155
      %v1192 = vmul.f32 %v1172, %v1156
      %v1193 = vmul.f32 %v1172, %v1157
      %v1194 = vmul.f32 %v1172, %v1158
      %v1195 = vmul.f32 %v1172, %v1159
      %v1196 = vmul.f32 %v1172, %v1160
      %v1197 = vmul.f32 %v1172, %v1161
      %v1198 = vmul.f32 %v1172, %v1162
      %v1199 = vmul.f32 %v1172, %v1163
      %v1200 = vmul.f32 %v1172, %v1164
      %v1201 = vmul.f32 %v1172, %v1165
      %v1202 = vmul.f32 %v1172, %v1166
      %v1203 = vmul.f32 %v1172, %v1167
      %v1204 = vmul.f32 %v1172, %v1168
      %v1205 = vmul.f32 %v913, %v1173
      %v1206 = vmul.f32 %v914, %v1174
      %v1207 = vmul.f32 %v915, %v1175
      %v1208 = vmul.f32 %v916, %v1176
      %v1209 = vmul.f32 %v917, %v1177
      %v1210 = vmul.f32 %v918, %v1178
      %v1211 = vmul.f32 %v919, %v1179
      %v1212 = vmul.f32 %v920, %v1180
      %v1213 = vmul.f32 %v921, %v1181
      %v1214 = vmul.f32 %v922, %v1182
      %v1215 = vmul.f32 %v923, %v1183
      %v1216 = vmul.f32 %v924, %v1184
      %v1217 = vmul.f32 %v925, %v1185
      %v1218 = vmul.f32 %v926, %v1186
      %v1219 = vmul.f32 %v927, %v1187
      %v1220 = vmul.f32 %v928, %v1188
      %v1221 = vmul.f32 %v929, %v1189
      %v1222 = vmul.f32 %v930, %v1190
      %v1223 = vmul.f32 %v931, %v1191
      %v1224 = vmul.f32 %v932, %v1192
      %v1225 = vmul.f32 %v933, %v1193
      %v1226 = vmul.f32 %v934, %v1194
      %v1227 = vmul.f32 %v935, %v1195
      %v1228 = vmul.f32 %v936, %v1196
      %v1229 = vmul.f32 %v937, %v1197
      %v1230 = vmul.f32 %v938, %v1198
      %v1231 = vmul.f32 %v939, %v1199
      %v1232 = vmul.f32 %v940, %v1200
      %v1233 = vmul.f32 %v941, %v1201
      %v1234 = vmul.f32 %v942, %v1202
      %v1235 = vmul.f32 %v943, %v1203
      %v1236 = vmul.f32 %v944, %v1204
      %v1237 = vlaneseq
      %v1238 = vshrl.u32 %v1237, 7
      %v1239 = vsub.s32 0, %v1238
      %v1240 = vrot.slane %v227, %v1239
      %v1241 = vadd.f32 %v1205, %v1240
      %v1242 = vadd.f32 %v1206, %v1240
      %v1243 = vadd.f32 %v1207, %v1240
      %v1244 = vadd.f32 %v1208, %v1240
      %v1245 = vadd.f32 %v1209, %v1240
      %v1246 = vadd.f32 %v1210, %v1240
      %v1247 = vadd.f32 %v1211, %v1240
      %v1248 = vadd.f32 %v1212, %v1240
      %v1249 = vadd.f32 %v1213, %v1240
      %v1250 = vadd.f32 %v1214, %v1240
      %v1251 = vadd.f32 %v1215, %v1240
      %v1252 = vadd.f32 %v1216, %v1240
      %v1253 = vadd.f32 %v1217, %v1240
      %v1254 = vadd.f32 %v1218, %v1240
      %v1255 = vadd.f32 %v1219, %v1240
      %v1256 = vadd.f32 %v1220, %v1240
      %v1257 = vadd.f32 %v1221, %v1240
      %v1258 = vadd.f32 %v1222, %v1240
      %v1259 = vadd.f32 %v1223, %v1240
      %v1260 = vadd.f32 %v1224, %v1240
      %v1261 = vadd.f32 %v1225, %v1240
      %v1262 = vadd.f32 %v1226, %v1240
      %v1263 = vadd.f32 %v1227, %v1240
      %v1264 = vadd.f32 %v1228, %v1240
      %v1265 = vadd.f32 %v1229, %v1240
      %v1266 = vadd.f32 %v1230, %v1240
      %v1267 = vadd.f32 %v1231, %v1240
      %v1268 = vadd.f32 %v1232, %v1240
      %v1269 = vadd.f32 %v1233, %v1240
      %v1270 = vadd.f32 %v1234, %v1240
      %v1271 = vadd.f32 %v1235, %v1240
      %v1272 = vadd.f32 %v1236, %v1240
      %v1273 = vpack.c.bf16 %v720, %v719
      %v1274 = vpack.c.bf16 %v722, %v721
      %v1275 = vpack.c.bf16 %v724, %v723
      %v1276 = vpack.c.bf16 %v726, %v725
      %v1277 = vpack.c.bf16 %v728, %v727
      %v1278 = vpack.c.bf16 %v730, %v729
      %v1279 = vpack.c.bf16 %v732, %v731
      %v1280 = vpack.c.bf16 %v734, %v733
      %v1281 = vpack.c.bf16 %v736, %v735
      %v1282 = vpack.c.bf16 %v738, %v737
      %v1283 = vpack.c.bf16 %v740, %v739
      %v1284 = vpack.c.bf16 %v742, %v741
      %v1285 = vpack.c.bf16 %v744, %v743
      %v1286 = vpack.c.bf16 %v746, %v745
      %v1287 = vpack.c.bf16 %v748, %v747
      %v1288 = vpack.c.bf16 %v750, %v749
      %v1289 = vpack.c.bf16 %v1242, %v1241
      %v1290 = vpack.c.bf16 %v1244, %v1243
      %v1291 = vpack.c.bf16 %v1246, %v1245
      %v1292 = vpack.c.bf16 %v1248, %v1247
      %v1293 = vpack.c.bf16 %v1250, %v1249
      %v1294 = vpack.c.bf16 %v1252, %v1251
      %v1295 = vpack.c.bf16 %v1254, %v1253
      %v1296 = vpack.c.bf16 %v1256, %v1255
      %v1297 = vpack.c.bf16 %v1258, %v1257
      %v1298 = vpack.c.bf16 %v1260, %v1259
      %v1299 = vpack.c.bf16 %v1262, %v1261
      %v1300 = vpack.c.bf16 %v1264, %v1263
      %v1301 = vpack.c.bf16 %v1266, %v1265
      %v1302 = vpack.c.bf16 %v1268, %v1267
      %v1303 = vpack.c.bf16 %v1270, %v1269
      %v1304 = vpack.c.bf16 %v1272, %v1271
      %1321 = vrot.lane.b32.xlu0 %v1289, 32
      %v1322 = vpop.permute.xlu0 %1321
      %1323 = vrot.lane.b32.xlu0 %v1290, 32
      %v1324 = vpop.permute.xlu0 %1323
      %1325 = vrot.lane.b32.xlu0 %v1291, 32
      %v1326 = vpop.permute.xlu0 %1325
      %1327 = vrot.lane.b32.xlu0 %v1292, 32
      %v1328 = vpop.permute.xlu0 %1327
      %1329 = vrot.lane.b32.xlu0 %v1293, 32
      %v1330 = vpop.permute.xlu0 %1329
      %1331 = vrot.lane.b32.xlu0 %v1294, 32
      %v1332 = vpop.permute.xlu0 %1331
      %1333 = vrot.lane.b32.xlu0 %v1295, 32
      %v1334 = vpop.permute.xlu0 %1333
      %1335 = vrot.lane.b32.xlu0 %v1296, 32
      %v1336 = vpop.permute.xlu0 %1335
      %1337 = vrot.lane.b32.xlu0 %v1297, 32
      %v1338 = vpop.permute.xlu0 %1337
      %1339 = vrot.lane.b32.xlu0 %v1298, 32
      %v1340 = vpop.permute.xlu0 %1339
      %1341 = vrot.lane.b32.xlu0 %v1299, 32
      %v1342 = vpop.permute.xlu0 %1341
      %1343 = vrot.lane.b32.xlu0 %v1300, 32
      %v1344 = vpop.permute.xlu0 %1343
      %1345 = vrot.lane.b32.xlu0 %v1301, 32
      %v1346 = vpop.permute.xlu0 %1345
      %1347 = vrot.lane.b32.xlu0 %v1302, 32
      %v1348 = vpop.permute.xlu0 %1347
      %1349 = vrot.lane.b32.xlu0 %v1303, 32
      %v1350 = vpop.permute.xlu0 %1349
      %1351 = vrot.lane.b32.xlu0 %v1304, 32
      %v1352 = vpop.permute.xlu0 %1351
      %v1355 = vsel %vm261, %v1273, %v1322
      %v1358 = vsel %vm261, %v1274, %v1324
      %v1361 = vsel %vm261, %v1275, %v1326
      %v1364 = vsel %vm261, %v1276, %v1328
      %v1367 = vsel %vm261, %v1277, %v1330
      %v1370 = vsel %vm261, %v1278, %v1332
      %v1373 = vsel %vm261, %v1279, %v1334
      %v1376 = vsel %vm261, %v1280, %v1336
      %v1379 = vsel %vm261, %v1281, %v1338
      %v1382 = vsel %vm261, %v1282, %v1340
      %v1385 = vsel %vm261, %v1283, %v1342
      %v1388 = vsel %vm261, %v1284, %v1344
      %v1391 = vsel %vm261, %v1285, %v1346
      %v1394 = vsel %vm261, %v1286, %v1348
      %v1397 = vsel %vm261, %v1287, %v1350
      %v1400 = vsel %vm261, %v1288, %v1352
      %v1401 = vld [vmem:[%s3] sm:$0xf]
      %v1402 = vld [vmem:[%s3 + $0x4] sm:$0xf]
      %v1403 = vld [vmem:[%s3 + $0x8] sm:$0xf]
      %v1404 = vld [vmem:[%s3 + $0xc] sm:$0xf]
      %v1405 = vld [vmem:[%s3 + $0x10] sm:$0xf]
      %v1406 = vld [vmem:[%s3 + $0x14] sm:$0xf]
      %v1407 = vlaneseq
      %v1408 = vshrl.u32 %v1407, 7
      %v1409 = vsub.s32 0, %v1408
      %v1410 = vrot.slane %v228, %v1409
      %v1417 = vunpack.c.l.b16 %v1401
      %v1418 = vunpack.c.l.b16 %v1402
      %v1419 = vunpack.c.l.b16 %v1403
      %v1420 = vunpack.c.l.b16 %v1404
      %v1421 = vunpack.c.l.b16 %v1405
      %v1422 = vunpack.c.l.b16 %v1406
      %v1423 = vpack.c.b16 %v1418, %v1417
      %v1424 = vpack.c.b16 %v1420, %v1419
      %v1425 = vpack.c.b16 %v1422, %v1421
      %vm1429 = vcmask 392192
      %v1430 = vsel %vm1429, %v1355, 0
      %v1432 = vsel %vm1429, %v1358, 0
      %v1434 = vsel %vm1429, %v1361, 0
      %v1436 = vsel %vm1429, %v1364, 0
      %v1438 = vsel %vm1429, %v1367, 0
      %v1440 = vsel %vm1429, %v1370, 0
      %v1442 = vsel %vm1429, %v1373, 0
      %v1444 = vsel %vm1429, %v1376, 0
      %v1446 = vsel %vm1429, %v1379, 0
      %v1448 = vsel %vm1429, %v1382, 0
      %v1450 = vsel %vm1429, %v1385, 0
      %v1452 = vsel %vm1429, %v1388, 0
      %v1454 = vsel %vm1429, %v1391, 0
      %v1456 = vsel %vm1429, %v1394, 0
      %v1458 = vsel %vm1429, %v1397, 0
      %v1460 = vsel %vm1429, %v1400, 0
      %1462 = vmatprep.subr.bf16.mxu0 0
      %1463 = vmatpush1.bf16.msra.mxu0 %v1423
      %1464 = vmatprep.subr.bf16.mxu0 0
      %1465 = vmatpush1.bf16.msra.mxu0 %v1424
      %1466 = vmatprep.subr.bf16.mxu0 0
      %1467 = vmatpush1.bf16.msra.mxu0 %v1425
      %1468 = vmatprep.subr.bf16.mxu0 0
      %1469 = vmatpush1.bf16.msra.mxu0 0
      %1470 = vmatprep.subr.bf16.mxu0 0
      %1471 = vmatpush1.bf16.msra.mxu0 0
      %1472 = vmatprep.subr.bf16.mxu0 0
      %1473 = vmatpush1.bf16.msra.mxu0 0
      %1474 = vmatprep.subr.bf16.mxu0 0
      %1475 = vmatpush1.bf16.msra.mxu0 0
      %1476 = vmatprep.subr.bf16.mxu0 0
      %1477 = vmatpush1.bf16.msra.mxu0 0
      %1478 = vmatprep.subr.bf16.mxu0 0
      %1479 = vmatpush1.bf16.msra.mxu0 0
      %1480 = vmatprep.subr.bf16.mxu0 0
      %1481 = vmatpush1.bf16.msra.mxu0 0
      %1482 = vmatprep.subr.bf16.mxu0 0
      %1483 = vmatpush1.bf16.msra.mxu0 0
      %1484 = vmatprep.subr.bf16.mxu0 0
      %1485 = vmatpush1.bf16.msra.mxu0 0
      %1486 = vmatprep.subr.bf16.mxu0 0
      %1487 = vmatpush1.bf16.msra.mxu0 0
      %1488 = vmatprep.subr.bf16.mxu0 0
      %1489 = vmatpush1.bf16.msra.mxu0 0
      %1490 = vmatprep.subr.bf16.mxu0 0
      %1491 = vmatpush1.bf16.msra.mxu0 0
      %1492 = vmatprep.subr.bf16.mxu0 0
      %1493 = vmatpush1.bf16.msra.mxu0 0
      %1494 = vmatprep.mubr.bf16.mxu0 0
      %1495 = vmatmul.mubr.bf16.gmra.mrb[0].mxu0 %v1430
      %v1496 = vpop.f32.mrb[0].mxu0
      %v1497 = vadd.f32 %v1410, %v1496
      %v1498 = vpop.f32.mrb[0].mxu0
      %v1499 = vpop.f32.mrb[0].mxu0
      %v1500 = vadd.f32 %v1410, %v1499
      %v1501 = vpop.f32.mrb[0].mxu0
      %1502 = vmatprep.mubr.bf16.mxu0 0
      %1503 = vmatmul.mubr.bf16.gmra.mrb[0].mxu0 %v1432
      %v1504 = vpop.f32.mrb[0].mxu0
      %v1505 = vadd.f32 %v1410, %v1504
      %v1506 = vpop.f32.mrb[0].mxu0
      %v1507 = vpop.f32.mrb[0].mxu0
      %v1508 = vadd.f32 %v1410, %v1507
      %v1509 = vpop.f32.mrb[0].mxu0
      %1510 = vmatprep.mubr.bf16.mxu0 0
      %1511 = vmatmul.mubr.bf16.gmra.mrb[0].mxu0 %v1434
      %v1512 = vpop.f32.mrb[0].mxu0
      %v1513 = vadd.f32 %v1410, %v1512
      %v1514 = vpop.f32.mrb[0].mxu0
      %v1515 = vpop.f32.mrb[0].mxu0
      %v1516 = vadd.f32 %v1410, %v1515
      %v1517 = vpop.f32.mrb[0].mxu0
      %1518 = vmatprep.mubr.bf16.mxu0 0
      %1519 = vmatmul.mubr.bf16.gmra.mrb[0].mxu0 %v1436
      %v1520 = vpop.f32.mrb[0].mxu0
      %v1521 = vadd.f32 %v1410, %v1520
      %v1522 = vpop.f32.mrb[0].mxu0
      %v1523 = vpop.f32.mrb[0].mxu0
      %v1524 = vadd.f32 %v1410, %v1523
      %v1525 = vpop.f32.mrb[0].mxu0
      %1526 = vmatprep.mubr.bf16.mxu0 0
      %1527 = vmatmul.mubr.bf16.gmra.mrb[0].mxu0 %v1438
      %v1528 = vpop.f32.mrb[0].mxu0
      %v1529 = vadd.f32 %v1410, %v1528
      %v1530 = vpop.f32.mrb[0].mxu0
      %v1531 = vpop.f32.mrb[0].mxu0
      %v1532 = vadd.f32 %v1410, %v1531
      %v1533 = vpop.f32.mrb[0].mxu0
      %1534 = vmatprep.mubr.bf16.mxu0 0
      %1535 = vmatmul.mubr.bf16.gmra.mrb[0].mxu0 %v1440
      %v1536 = vpop.f32.mrb[0].mxu0
      %v1537 = vadd.f32 %v1410, %v1536
      %v1538 = vpop.f32.mrb[0].mxu0
      %v1539 = vpop.f32.mrb[0].mxu0
      %v1540 = vadd.f32 %v1410, %v1539
      %v1541 = vpop.f32.mrb[0].mxu0
      %1542 = vmatprep.mubr.bf16.mxu0 0
      %1543 = vmatmul.mubr.bf16.gmra.mrb[0].mxu0 %v1442
      %v1544 = vpop.f32.mrb[0].mxu0
      %v1545 = vadd.f32 %v1410, %v1544
      %v1546 = vpop.f32.mrb[0].mxu0
      %v1547 = vpop.f32.mrb[0].mxu0
      %v1548 = vadd.f32 %v1410, %v1547
      %v1549 = vpop.f32.mrb[0].mxu0
      %1550 = vmatprep.mubr.bf16.mxu0 0
      %1551 = vmatmul.mubr.bf16.gmra.mrb[0].mxu0 %v1444
      %v1552 = vpop.f32.mrb[0].mxu0
      %v1553 = vadd.f32 %v1410, %v1552
      %v1554 = vpop.f32.mrb[0].mxu0
      %v1555 = vpop.f32.mrb[0].mxu0
      %v1556 = vadd.f32 %v1410, %v1555
      %v1557 = vpop.f32.mrb[0].mxu0
      %1558 = vmatprep.mubr.bf16.mxu0 0
      %1559 = vmatmul.mubr.bf16.gmra.mrb[0].mxu0 %v1446
      %v1560 = vpop.f32.mrb[0].mxu0
      %v1561 = vadd.f32 %v1410, %v1560
      %v1562 = vpop.f32.mrb[0].mxu0
      %v1563 = vpop.f32.mrb[0].mxu0
      %v1564 = vadd.f32 %v1410, %v1563
      %v1565 = vpop.f32.mrb[0].mxu0
      %1566 = vmatprep.mubr.bf16.mxu0 0
      %1567 = vmatmul.mubr.bf16.gmra.mrb[0].mxu0 %v1448
      %v1568 = vpop.f32.mrb[0].mxu0
      %v1569 = vadd.f32 %v1410, %v1568
      %v1570 = vpop.f32.mrb[0].mxu0
      %v1571 = vpop.f32.mrb[0].mxu0
      %v1572 = vadd.f32 %v1410, %v1571
      %v1573 = vpop.f32.mrb[0].mxu0
      %1574 = vmatprep.mubr.bf16.mxu0 0
      %1575 = vmatmul.mubr.bf16.gmra.mrb[0].mxu0 %v1450
      %v1576 = vpop.f32.mrb[0].mxu0
      %v1577 = vadd.f32 %v1410, %v1576
      %v1578 = vpop.f32.mrb[0].mxu0
      %v1579 = vpop.f32.mrb[0].mxu0
      %v1580 = vadd.f32 %v1410, %v1579
      %v1581 = vpop.f32.mrb[0].mxu0
      %1582 = vmatprep.mubr.bf16.mxu0 0
      %1583 = vmatmul.mubr.bf16.gmra.mrb[0].mxu0 %v1452
      %v1584 = vpop.f32.mrb[0].mxu0
      %v1585 = vadd.f32 %v1410, %v1584
      %v1586 = vpop.f32.mrb[0].mxu0
      %v1587 = vpop.f32.mrb[0].mxu0
      %v1588 = vadd.f32 %v1410, %v1587
      %v1589 = vpop.f32.mrb[0].mxu0
      %1590 = vmatprep.mubr.bf16.mxu0 0
      %1591 = vmatmul.mubr.bf16.gmra.mrb[0].mxu0 %v1454
      %v1592 = vpop.f32.mrb[0].mxu0
      %v1593 = vadd.f32 %v1410, %v1592
      %v1594 = vpop.f32.mrb[0].mxu0
      %v1595 = vpop.f32.mrb[0].mxu0
      %v1596 = vadd.f32 %v1410, %v1595
      %v1597 = vpop.f32.mrb[0].mxu0
      %1598 = vmatprep.mubr.bf16.mxu0 0
      %1599 = vmatmul.mubr.bf16.gmra.mrb[0].mxu0 %v1456
      %v1600 = vpop.f32.mrb[0].mxu0
      %v1601 = vadd.f32 %v1410, %v1600
      %v1602 = vpop.f32.mrb[0].mxu0
      %v1603 = vpop.f32.mrb[0].mxu0
      %v1604 = vadd.f32 %v1410, %v1603
      %v1605 = vpop.f32.mrb[0].mxu0
      %1606 = vmatprep.mubr.bf16.mxu0 0
      %1607 = vmatmul.mubr.bf16.gmra.mrb[0].mxu0 %v1458
      %v1608 = vpop.f32.mrb[0].mxu0
      %v1609 = vadd.f32 %v1410, %v1608
      %v1610 = vpop.f32.mrb[0].mxu0
      %v1611 = vpop.f32.mrb[0].mxu0
      %v1612 = vadd.f32 %v1410, %v1611
      %v1613 = vpop.f32.mrb[0].mxu0
      %1614 = vmatprep.mubr.bf16.mxu0 0
      %1615 = vmatmul.mubr.bf16.gmra.mrb[0].mxu0 %v1460
      %v1616 = vpop.f32.mrb[0].mxu0
      %v1617 = vadd.f32 %v1410, %v1616
      %v1618 = vpop.f32.mrb[0].mxu0
      %v1619 = vpop.f32.mrb[0].mxu0
      %v1620 = vadd.f32 %v1410, %v1619
      %v1621 = vpop.f32.mrb[0].mxu0
      %1622 = vdwg.mxu0
      %1623 = vst.msk [vmem:[%s221] sm:$0xff] %vm261, %v1497
      %1624 = vst.msk [vmem:[%s221 + $0x8] sm:$0xff] %vm261, %v1500
      %1625 = vst.msk [vmem:[%s221 + $0x10] sm:$0xff] %vm261, %v1505
      %1626 = vst.msk [vmem:[%s221 + $0x18] sm:$0xff] %vm261, %v1508
      %1627 = vst.msk [vmem:[%s221 + $0x20] sm:$0xff] %vm261, %v1513
      %1628 = vst.msk [vmem:[%s221 + $0x28] sm:$0xff] %vm261, %v1516
      %1629 = vst.msk [vmem:[%s221 + $0x30] sm:$0xff] %vm261, %v1521
      %1630 = vst.msk [vmem:[%s221 + $0x38] sm:$0xff] %vm261, %v1524
      %1631 = vst.msk [vmem:[%s221 + $0x40] sm:$0xff] %vm261, %v1529
      %1632 = vst.msk [vmem:[%s221 + $0x48] sm:$0xff] %vm261, %v1532
      %1633 = vst.msk [vmem:[%s221 + $0x50] sm:$0xff] %vm261, %v1537
      %1634 = vst.msk [vmem:[%s221 + $0x58] sm:$0xff] %vm261, %v1540
      %1635 = vst.msk [vmem:[%s221 + $0x60] sm:$0xff] %vm261, %v1545
      %1636 = vst.msk [vmem:[%s221 + $0x68] sm:$0xff] %vm261, %v1548
      %1637 = vst.msk [vmem:[%s221 + $0x70] sm:$0xff] %vm261, %v1553
      %1638 = vst.msk [vmem:[%s221 + $0x78] sm:$0xff] %vm261, %v1556
      %1639 = vst.msk [vmem:[%s221 + $0x80] sm:$0xff] %vm261, %v1561
      %1640 = vst.msk [vmem:[%s221 + $0x88] sm:$0xff] %vm261, %v1564
      %1641 = vst.msk [vmem:[%s221 + $0x90] sm:$0xff] %vm261, %v1569
      %1642 = vst.msk [vmem:[%s221 + $0x98] sm:$0xff] %vm261, %v1572
      %1643 = vst.msk [vmem:[%s221 + $0xa0] sm:$0xff] %vm261, %v1577
      %1644 = vst.msk [vmem:[%s221 + $0xa8] sm:$0xff] %vm261, %v1580
      %1645 = vst.msk [vmem:[%s221 + $0xb0] sm:$0xff] %vm261, %v1585
      %1646 = vst.msk [vmem:[%s221 + $0xb8] sm:$0xff] %vm261, %v1588
      %1647 = vst.msk [vmem:[%s221 + $0xc0] sm:$0xff] %vm261, %v1593
      %1648 = vst.msk [vmem:[%s221 + $0xc8] sm:$0xff] %vm261, %v1596
      %1649 = vst.msk [vmem:[%s221 + $0xd0] sm:$0xff] %vm261, %v1601
      %1650 = vst.msk [vmem:[%s221 + $0xd8] sm:$0xff] %vm261, %v1604
      %1651 = vst.msk [vmem:[%s221 + $0xe0] sm:$0xff] %vm261, %v1609
      %1652 = vst.msk [vmem:[%s221 + $0xe8] sm:$0xff] %vm261, %v1612
      %1653 = vst.msk [vmem:[%s221 + $0xf0] sm:$0xff] %vm261, %v1617
      %1654 = vst.msk [vmem:[%s221 + $0xf8] sm:$0xff] %vm261, %v1620
      %s1655 = smul.u32 32, %s15
      %p1656 = scmp.lt.s32.totalorder %s1655, 63
      %s1657 = scalar_select %p1656, %s1655, 63
      %s1658 = smul.addr %s1657, 8
      %s1659 = scalar_lea.vmem %s4, %s1658
      // Predicated region
      $region37: #{prenorm_pallas.1} parent=35 // pred_check
        %p1660 = pneg %p127
      $region38: #{prenorm_pallas.1} parent=35 // pred_check_branch
        %1662 = sbr.rel (%p1660) target = $region40
      $region39: #{prenorm_pallas.1} parent=35 // pred_region
        %s1663 = smul.u32 32, %s15
      $region40: #{prenorm_pallas.1} parent=35 // pred_fallthru
        _
    $region36: #{prenorm_pallas.1} parent=5 // pred_fallthru
      _
    %p1664 = scmp.le.s32.totalorder 2, %s10
    // Predicated region
    $region41: #{prenorm_pallas.1} parent=5 // pred_check
      %p1665 = pneg %p1664
    $region42: #{prenorm_pallas.1} parent=5 // pred_check_branch
      %1667 = sbr.rel (%p1665) target = $region44
    $region43: #{prenorm_pallas.1} parent=5 // pred_region
      %s1668 = ssub.s32 %s10, 2
      // Predicated region
      $region45: #{prenorm_pallas.1} parent=43 // pred_check
        %p1669 = pneg %p133
      $region46: #{prenorm_pallas.1} parent=43 // pred_check_branch
        %1671 = sbr.rel (%p1669) target = $region48
      $region47: #{prenorm_pallas.1} parent=43 // pred_region
        %s1672 = smul.u32 32, %s16
        %p1673 = scmp.lt.s32.totalorder %s1672, 63
        %s1674 = scalar_select %p1673, %s1672, 63
        %s1675 = smul.addr %s1674, 8
        %s1676 = scalar_lea.vmem %s4, %s1675
      $region48: #{prenorm_pallas.1} parent=43 // pred_fallthru
        _
    $region44: #{prenorm_pallas.1} parent=5 // pred_fallthru
      _
  $region6: #{prenorm_pallas.1} parent=0 // loop_footer
    %s14 = sadd.s32 1, %s10
  $region7: #{prenorm_pallas.1} parent=0 // loop_footer_branch
    %9 = sbr.rel target = $region3
  $region8: #{prenorm_pallas.1} parent=0 // loop_exit
    _

</llo_original>
